<compile_context>
chip_gen: v7x
topology: tpu7x:2x2x1
jax: 0.10.0
libtpu: 0.0.40
codegen_flags: <defaults>
</compile_context>

<pallas_src>
import jax
import jax.numpy as jnp
from jax.experimental import pallas as pl
from jax.experimental.pallas import tpu as pltpu


_VMEM_LIMIT = 32 * 1024 * 1024   # safe on v5e/v6e (128 MiB) and v7x (64 MiB)


# ------------------------------- helpers ------------------------------------

def _round_up(x, m):
    return (x + m - 1) // m * m


def _pick_tm(m, stream_bytes_per_row, resident_bytes,
             budget_bytes=24 << 20, tm_cap=2048):
    """Rows per M-tile: double-buffered streamed rows + resident blocks fit budget,
    and (v7x) at least 2 grid steps whenever M allows so both TCs get work."""
    avail = max(budget_bytes - 2 * resident_bytes, 1 << 20)
    tm = avail // max(2 * stream_bytes_per_row, 1)
    tm = int(max(8, min(tm_cap, tm)))
    tm = (tm // 8) * 8
    m8 = _round_up(m, 8)
    if m8 >= 16:
        tm = min(tm, _round_up((m8 + 1) // 2, 8))
    else:
        tm = min(tm, m8)
    return max(tm, 8)


# ----------------------------- Pallas kernels --------------------------------

def _mm_bias_relu_kernel(p_ref, w_ref, b_ref, o_ref):
    # p: [TM, Kp] bf16, w: [Kp, Np] bf16 (BN scale pre-folded), b: [1, Np] f32.
    acc = jnp.dot(p_ref[...], w_ref[...], preferred_element_type=jnp.float32)
    o_ref[...] = jnp.maximum(acc + b_ref[...], 0.0).astype(o_ref.dtype)


def _mm_dual_bias_relu_kernel(p_ref, w0_ref, b0_ref, w1_ref, b1_ref,
                              o0_ref, o1_ref):
    # Fused conv_init (3x3/s2) + left1 (1x1): second matmul runs on the first
    # result's channels entirely in VMEM/vregs.
    acc0 = jnp.dot(p_ref[...], w0_ref[...], preferred_element_type=jnp.float32)
    y0 = jnp.maximum(acc0 + b0_ref[...], 0.0)
    o0_ref[...] = y0.astype(o0_ref.dtype)
    acc1 = jnp.dot(y0.astype(jnp.bfloat16), w1_ref[...],
                   preferred_element_type=jnp.float32)
    o1_ref[...] = jnp.maximum(acc1 + b1_ref[...], 0.0).astype(o1_ref.dtype)


def _maxpool_kernel(e_ref, od_ref, o_ref):
    # e:  [3, TM, (OW+1)*C]  even input columns (3 row taps)
    # od: [3, TM,  OW   *C]  odd  input columns (3 row taps)
    # out[:, ow*C + c] = max over 3x3 window.
    lo = o_ref.shape[-1]
    c = e_ref.shape[-1] - lo
    em = jnp.max(e_ref[...], axis=0)          # row-tap max, even columns
    om = jnp.max(od_ref[...], axis=0)         # row-tap max, odd columns
    m = jnp.maximum(em[:, :lo], em[:, c:])    # columns 2*ow and 2*ow+2
    o_ref[...] = jnp.maximum(m, om).astype(o_ref.dtype)


# --------------------------- pallas_call wrappers -----------------------------

def _conv_call(patches_bf16, layer, out_dtype):
    """[M, K] bf16 patches @ prepared weight -> [M, Cout] (bias + ReLU fused)."""
    M, K = patches_bf16.shape
    Kp, Np = layer["w"].shape
    obytes = jnp.dtype(out_dtype).itemsize
    stream = Kp * 2 + Np * obytes
    resident = Kp * Np * 2 + Np * 4
    tm = _pick_tm(M, stream, resident)
    Mp = _round_up(M, tm)
    p = jnp.pad(patches_bf16, ((0, Mp - M), (0, Kp - K)))

    out = pl.pallas_call(
        _mm_bias_relu_kernel,
        out_shape=jax.ShapeDtypeStruct((Mp, Np), out_dtype),
        grid=(Mp // tm,),
        in_specs=[
            pl.BlockSpec((tm, Kp), lambda i: (i, 0)),     # streamed over M
            pl.BlockSpec((Kp, Np), lambda i: (0, 0)),     # resident weight
            pl.BlockSpec((1, Np), lambda i: (0, 0)),      # resident bias
        ],
        out_specs=pl.BlockSpec((tm, Np), lambda i: (i, 0)),
        compiler_params=pltpu.CompilerParams(
            dimension_semantics=("parallel",),
            vmem_limit_bytes=_VMEM_LIMIT),
        cost_estimate=pl.CostEstimate(
            flops=2 * Mp * Kp * Np, transcendentals=0,
            bytes_accessed=Mp * Kp * 2 + Kp * Np * 2 + Np * 4 + Mp * Np * obytes),
    )(p, layer["w"], layer["b"])
    return out[:M, :layer["Cout"]]


def _conv_init_left1_call(patches_bf16, l0, l1):
    """Fused conv_init + left1 (1x1).  Returns (x0 [M,C0], xl1 [M,C1]) bf16."""
    M, K = patches_bf16.shape
    Kp, Np0 = l0["w"].shape
    Kp1, Np1 = l1["w"].shape
    assert Kp1 == Np0, "left1 contraction must match conv_init's padded Cout"
    stream = Kp * 2 + Np0 * 2 + Np1 * 2
    resident = (Kp * Np0 + Kp1 * Np1) * 2 + (Np0 + Np1) * 4
    tm = _pick_tm(M, stream, resident)
    Mp = _round_up(M, tm)
    p = jnp.pad(patches_bf16, ((0, Mp - M), (0, Kp - K)))

    x0, x1 = pl.pallas_call(
        _mm_dual_bias_relu_kernel,
        out_shape=(jax.ShapeDtypeStruct((Mp, Np0), jnp.bfloat16),
                   jax.ShapeDtypeStruct((Mp, Np1), jnp.bfloat16)),
        grid=(Mp // tm,),
        in_specs=[
            pl.BlockSpec((tm, Kp), lambda i: (i, 0)),
            pl.BlockSpec((Kp, Np0), lambda i: (0, 0)),
            pl.BlockSpec((1, Np0), lambda i: (0, 0)),
            pl.BlockSpec((Kp1, Np1), lambda i: (0, 0)),
            pl.BlockSpec((1, Np1), lambda i: (0, 0)),
        ],
        out_specs=(pl.BlockSpec((tm, Np0), lambda i: (i, 0)),
                   pl.BlockSpec((tm, Np1), lambda i: (i, 0))),
        compiler_params=pltpu.CompilerParams(
            dimension_semantics=("parallel",),
            vmem_limit_bytes=_VMEM_LIMIT),
        cost_estimate=pl.CostEstimate(
            flops=2 * Mp * (Kp * Np0 + Kp1 * Np1), transcendentals=0,
            bytes_accessed=(Mp * Kp * 2 + (Kp * Np0 + Kp1 * Np1) * 2
                            + (Np0 + Np1) * 4 + Mp * (Np0 + Np1) * 2)),
    )(p, l0["w"], l0["b"], l1["w"], l1["b"])
    return x0[:M, :l0["Cout"]], x1[:M, :l1["Cout"]]


def maxpool_3x3_s2(x_nhwc):
    """nn.MaxPool2d(3, 2, 1) on a bf16 NHWC tensor, lane-dense folded output."""
    N, H, W, C = x_nhwc.shape
    OH = (H - 1) // 2 + 1
    OW = (W - 1) // 2 + 1
    xp = jnp.pad(x_nhwc, ((0, 0), (1, 1), (1, 1), (0, 0)),
                 mode="constant", constant_values=-jnp.inf)
    # 3 row-shifted planes only; horizontal taps are handled in-kernel.
    rows = jnp.stack([xp[:, i:i + 2 * (OH - 1) + 1:2, :, :] for i in range(3)],
                     axis=0)                               # [3, N, OH, W+2, C]
    ev = rows[:, :, :, 0:2 * OW + 1:2, :]                  # cols 0,2,...,2*OW
    od = rows[:, :, :, 1:2 * OW:2, :]                      # cols 1,3,...,2*OW-1
    M2 = N * OH
    Le, Lo = (OW + 1) * C, OW * C
    ev = ev.reshape(3, M2, Le)
    od = od.reshape(3, M2, Lo)

    tm = _pick_tm(M2, 3 * (Le + Lo) * 2 + Lo * 2, 0)
    M2p = _round_up(M2, tm)
    ev = jnp.pad(ev, ((0, 0), (0, M2p - M2), (0, 0)))
    od = jnp.pad(od, ((0, 0), (0, M2p - M2), (0, 0)))

    out = pl.pallas_call(
        _maxpool_kernel,
        out_shape=jax.ShapeDtypeStruct((M2p, Lo), x_nhwc.dtype),
        grid=(M2p // tm,),
        in_specs=[pl.BlockSpec((3, tm, Le), lambda i: (0, i, 0)),
                  pl.BlockSpec((3, tm, Lo), lambda i: (0, i, 0))],
        out_specs=pl.BlockSpec((tm, Lo), lambda i: (i, 0)),
        compiler_params=pltpu.CompilerParams(
            dimension_semantics=("parallel",),
            vmem_limit_bytes=_VMEM_LIMIT),
        cost_estimate=pl.CostEstimate(
            flops=9 * M2p * Lo, transcendentals=0,
            bytes_accessed=3 * M2p * (Le + Lo) * 2 + M2p * Lo * 2),
    )(ev, od)
    return out[:M2].reshape(N, OH, OW, C)


# ------------------------------- JAX glue --------------------------------------

def _im2col_multi(xs, kh, kw, stride, pad):
    """im2col over a channel-concatenated input list (concat fused into patches).

    xs: list of [N,H,W,C_g] arrays; K ordering is (kh, kw, [C_0; C_1; ...]),
    matching an OIHW weight with Cin = sum(C_g) transposed to (KH,KW,Cin,Cout).
    """
    N, H, W, _ = xs[0].shape
    OH = (H + 2 * pad - kh) // stride + 1
    OW = (W + 2 * pad - kw) // stride + 1
    xps = [jnp.pad(x, ((0, 0), (pad, pad), (pad, pad), (0, 0))) for x in xs]
    cols = []
    for i in range(kh):
        for j in range(kw):
            for xp in xps:
                cols.append(xp[:, i:i + stride * OH:stride,
                               j:j + stride * OW:stride, :])
    patches = jnp.concatenate(cols, axis=-1)               # [N, OH, OW, Ktot]
    return patches.reshape(N * OH * OW, -1), OH, OW


def _fold_conv_bn(w_oihw, bn, eps=1e-5):
    """Fold eval-mode BN into the conv weight/bias; pad to MXU-friendly tiles."""
    gamma, beta, mean, var = bn
    Cout, Cin, KH, KW = w_oihw.shape
    scale = gamma / jnp.sqrt(var + eps)
    bias = beta - mean * scale
    K = KH * KW * Cin
    w = jnp.transpose(w_oihw, (2, 3, 1, 0)).reshape(K, Cout) * scale[None, :]
    Kp = _round_up(K, 128)
    Np = _round_up(Cout, 128)
    wp = jnp.pad(w, ((0, Kp - K), (0, Np - Cout))).astype(jnp.bfloat16)
    bp = jnp.pad(bias, (0, Np - Cout)).reshape(1, Np).astype(jnp.float32)
    return {"w": wp, "b": bp, "Cout": Cout}


def prepare_stem_params(params, eps=1e-5):
    """One-time BN folding / transpose / pad / bf16 cast (kept off the hot path)."""
    prep = {
        "conv_init": _fold_conv_bn(params["conv_init_w"], params["conv_init_bn"], eps),
        "left1": _fold_conv_bn(params["left1_w"], params["left1_bn"], eps),
        "left2": _fold_conv_bn(params["left2_w"], params["left2_bn"], eps),
        "conv_last": _fold_conv_bn(params["conv_last_w"], params["conv_last_bn"], eps),
    }
    assert prep["left1"]["w"].shape[0] == prep["conv_init"]["w"].shape[1]
    return prep


# ------------------------------ StemBlock fwd ----------------------------------

def stem_block_forward(x_nchw, prep):
    x = jnp.transpose(x_nchw, (0, 2, 3, 1)).astype(jnp.bfloat16)   # NCHW -> NHWC, bf16

    N = x.shape[0]

    # conv_init (3x3/s2 + BN + ReLU) fused with left1 (1x1 + BN + ReLU)
    p0, OH, OW = _im2col_multi([x], 3, 3, 2, 1)
    x0_flat, xl1_flat = _conv_init_left1_call(p0, prep["conv_init"], prep["left1"])
    x0 = x0_flat.reshape(N, OH, OW, -1)
    xl1 = xl1_flat.reshape(N, OH, OW, -1)

    # left branch tail: 3x3/s2 + BN + ReLU
    p1, OH2, OW2 = _im2col_multi([xl1], 3, 3, 2, 1)
    xl = _conv_call(p1, prep["left2"], jnp.bfloat16).reshape(N, OH2, OW2, -1)

    # right branch: MaxPool2d(3, 2, 1)
    xr = maxpool_3x3_s2(x0)

    # conv_last (3x3/s1 + BN + ReLU); channel concat fused into the patch build.
    p2, OH3, OW3 = _im2col_multi([xl, xr], 3, 3, 1, 1)
    out = _conv_call(p2, prep["conv_last"], jnp.float32).reshape(N, OH3, OW3, -1)

    return jnp.transpose(out, (0, 3, 1, 2))                        # NHWC -> NCHW


# ----------------------------- parameter setup ---------------------------------

def init_bn_params(key, c):
    k1, k2, k3, k4 = jax.random.split(key, 4)
    gamma = 1.0 + 0.1 * jax.random.normal(k1, (c,), jnp.float32)
    beta = 0.1 * jax.random.normal(k2, (c,), jnp.float32)
    mean = 0.05 * jax.random.normal(k3, (c,), jnp.float32)
    var = jax.random.uniform(k4, (c,), jnp.float32, 0.5, 1.5)
    return gamma, beta, mean, var


def init_stem_params(key, in_channels, out_channels):
    keys = jax.random.split(key, 8)
    mid = out_channels // 2
    return {
        "conv_init_w": 0.1 * jax.random.normal(keys[0], (out_channels, in_channels, 3, 3), jnp.float32),
        "conv_init_bn": init_bn_params(keys[1], out_channels),
        "left1_w": 0.1 * jax.random.normal(keys[2], (mid, out_channels, 1, 1), jnp.float32),
        "left1_bn": init_bn_params(keys[3], mid),
        "left2_w": 0.1 * jax.random.normal(keys[4], (out_channels, mid, 3, 3), jnp.float32),
        "left2_bn": init_bn_params(keys[5], out_channels),
        "conv_last_w": 0.1 * jax.random.normal(keys[6], (out_channels, 2 * out_channels, 3, 3), jnp.float32),
        "conv_last_bn": init_bn_params(keys[7], out_channels),
    }


# -------------------------- pure-XLA reference ---------------------------------

def _ref_conv_bn_relu(x_nchw, w, gamma, beta, mean, var, stride, eps=1e-5):
    pad = (w.shape[2] - 1) // 2
    y = jax.lax.conv_general_dilated(
        x_nchw, w, window_strides=(stride, stride),
        padding=[(pad, pad), (pad, pad)],
        dimension_numbers=("NCHW", "OIHW", "NCHW"))
    scale = gamma / jnp.sqrt(var + eps)
    bias = beta - mean * scale
    y = y * scale[None, :, None, None] + bias[None, :, None, None]
    return jnp.maximum(y, 0.0)


def _ref_maxpool(x_nchw):
    return jax.lax.reduce_window(
        x_nchw, -jnp.inf, jax.lax.max,
        window_dimensions=(1, 1, 3, 3), window_strides=(1, 1, 2, 2),
        padding=[(0, 0), (0, 0), (1, 1), (1, 1)])


def _ref_stem(x_nchw, p):
    x = _ref_conv_bn_relu(x_nchw, p["conv_init_w"], *p["conv_init_bn"], stride=2)
    xl = _ref_conv_bn_relu(x, p["left1_w"], *p["left1_bn"], stride=1)
    xl = _ref_conv_bn_relu(xl, p["left2_w"], *p["left2_bn"], stride=2)
    xr = _ref_maxpool(x)
    xc = jnp.concatenate([xl, xr], axis=1)
    return _ref_conv_bn_relu(xc, p["conv_last_w"], *p["conv_last_bn"], stride=1)


# ----------------------------------- main ---------------------------------------

if __name__ == "__main__":
    key = jax.random.PRNGKey(0)
    k_x, k_p = jax.random.split(key)

    in_channels, out_channels = 4, 16
    x = jax.random.normal(k_x, (2, in_channels, 16, 16), jnp.float32)   # NCHW
    params = init_stem_params(k_p, in_channels, out_channels)
    prepared = prepare_stem_params(params)

    fwd = jax.jit(lambda inp: stem_block_forward(inp, prepared))
    out = jax.block_until_ready(fwd(x))

    # Sanity: 16x16 -> conv_init /2 -> 8x8 -> left/right /2 -> 4x4
    assert out.shape == (2, out_channels, 4, 4), out.shape
    assert bool(jnp.all(jnp.isfinite(out)))

    # Numerical check vs plain-XLA f32 reference (bf16 MXU path -> loose tol).
    ref = jax.block_until_ready(_ref_stem(x, params))
    max_err = float(jnp.max(jnp.abs(out - ref)))
    assert max_err < 1e-1, max_err

    print("KERNEL_OK")
</pallas_src>

<mosaic_0001>
module attributes {stable_mosaic.version = 11 : i64} {
  func.func @_mm_dual_bias_relu_kernel(%arg0: i32, %arg1: memref<64x128xbf16, #tpu.memory_space<vmem>>, %arg2: memref<128x128xbf16, #tpu.memory_space<vmem>>, %arg3: memref<1x128xf32, #tpu.memory_space<vmem>>, %arg4: memref<128x128xbf16, #tpu.memory_space<vmem>>, %arg5: memref<1x128xf32, #tpu.memory_space<vmem>>, %arg6: memref<64x128xbf16, #tpu.memory_space<vmem>>, %arg7: memref<64x128xbf16, #tpu.memory_space<vmem>>) attributes {dimension_semantics = [#tpu.dimension_semantics<parallel>], iteration_bounds = array<i64: 2>, scalar_prefetch = 0 : i64, scratch_operands = 0 : i64, tpu.core_type = #tpu.core_type<tc>, window_params = [{transform_indices = @transform_0, window_bounds = array<i64: 64, 128>}, {pipeline_mode = #tpu.pipeline_mode<synchronous>, transform_indices = @transform_1, window_bounds = array<i64: 128, 128>}, {pipeline_mode = #tpu.pipeline_mode<synchronous>, transform_indices = @transform_2, window_bounds = array<i64: 1, 128>}, {pipeline_mode = #tpu.pipeline_mode<synchronous>, transform_indices = @transform_3, window_bounds = array<i64: 128, 128>}, {pipeline_mode = #tpu.pipeline_mode<synchronous>, transform_indices = @transform_4, window_bounds = array<i64: 1, 128>}, {transform_indices = @transform_5, window_bounds = array<i64: 64, 128>}, {transform_indices = @transform_6, window_bounds = array<i64: 64, 128>}]} {
    %c0 = arith.constant 0 : index
    %c0_0 = arith.constant 0 : index
    %0 = vector.load %arg1[%c0, %c0_0] : memref<64x128xbf16, #tpu.memory_space<vmem>>, vector<64x128xbf16>
    %c0_1 = arith.constant 0 : index
    %c0_2 = arith.constant 0 : index
    %1 = vector.load %arg2[%c0_1, %c0_2] : memref<128x128xbf16, #tpu.memory_space<vmem>>, vector<128x128xbf16>
    %cst = arith.constant dense<0.000000e+00> : vector<64x128xf32>
    %2 = tpu.matmul %0, %1, %cst {dimension_numbers = #tpu.dot_dimension_numbers<[1], [0], [0], [1], [0, 0, 1, 1], [], []>} : vector<64x128xbf16>, vector<128x128xbf16>, vector<64x128xf32> -> vector<64x128xf32>
    %c0_3 = arith.constant 0 : index
    %c0_4 = arith.constant 0 : index
    %3 = vector.load %arg3[%c0_3, %c0_4] : memref<1x128xf32, #tpu.memory_space<vmem>>, vector<1x128xf32>
    %4 = vector.broadcast %3 : vector<1x128xf32> to vector<64x128xf32>
    %5 = arith.addf %2, %4 : vector<64x128xf32>
    %cst_5 = arith.constant 0.000000e+00 : f32
    %6 = vector.broadcast %cst_5 : f32 to vector<64x128xf32>
    %7 = arith.maximumf %5, %6 : vector<64x128xf32>
    %8 = arith.truncf %7 : vector<64x128xf32> to vector<64x128xbf16>
    %c0_6 = arith.constant 0 : index
    %c0_7 = arith.constant 0 : index
    %9 = vector.load %arg6[%c0_6, %c0_7] : memref<64x128xbf16, #tpu.memory_space<vmem>>, vector<64x128xbf16>
    tpu.vector_store %arg6[%c0_6, %c0_7], %8 {strides = array<i32>} : memref<64x128xbf16, #tpu.memory_space<vmem>>, vector<64x128xbf16>,
    %10 = arith.truncf %7 : vector<64x128xf32> to vector<64x128xbf16>
    %c0_8 = arith.constant 0 : index
    %c0_9 = arith.constant 0 : index
    %11 = vector.load %arg4[%c0_8, %c0_9] : memref<128x128xbf16, #tpu.memory_space<vmem>>, vector<128x128xbf16>
    %cst_10 = arith.constant dense<0.000000e+00> : vector<64x128xf32>
    %12 = tpu.matmul %10, %11, %cst_10 {dimension_numbers = #tpu.dot_dimension_numbers<[1], [0], [0], [1], [0, 0, 1, 1], [], []>} : vector<64x128xbf16>, vector<128x128xbf16>, vector<64x128xf32> -> vector<64x128xf32>
    %c0_11 = arith.constant 0 : index
    %c0_12 = arith.constant 0 : index
    %13 = vector.load %arg5[%c0_11, %c0_12] : memref<1x128xf32, #tpu.memory_space<vmem>>, vector<1x128xf32>
    %14 = vector.broadcast %13 : vector<1x128xf32> to vector<64x128xf32>
    %15 = arith.addf %12, %14 : vector<64x128xf32>
    %cst_13 = arith.constant 0.000000e+00 : f32
    %16 = vector.broadcast %cst_13 : f32 to vector<64x128xf32>
    %17 = arith.maximumf %15, %16 : vector<64x128xf32>
    %18 = arith.truncf %17 : vector<64x128xf32> to vector<64x128xbf16>
    %c0_14 = arith.constant 0 : index
    %c0_15 = arith.constant 0 : index
    %19 = vector.load %arg7[%c0_14, %c0_15] : memref<64x128xbf16, #tpu.memory_space<vmem>>, vector<64x128xbf16>
    tpu.vector_store %arg7[%c0_14, %c0_15], %18 {strides = array<i32>} : memref<64x128xbf16, #tpu.memory_space<vmem>>, vector<64x128xbf16>,
    return
  }
  func.func @transform_0(%arg0: i32) -> (i32, i32) {
    %c0_i32 = arith.constant 0 : i32
    %c0_i32_0 = arith.constant 0 : i32
    return %arg0, %c0_i32 : i32, i32
  }
  func.func @transform_1(%arg0: i32) -> (i32, i32) {
    %c0_i32 = arith.constant 0 : i32
    %c0_i32_0 = arith.constant 0 : i32
    %c0_i32_1 = arith.constant 0 : i32
    return %c0_i32, %c0_i32_0 : i32, i32
  }
  func.func @transform_2(%arg0: i32) -> (i32, i32) {
    %c0_i32 = arith.constant 0 : i32
    %c0_i32_0 = arith.constant 0 : i32
    %c0_i32_1 = arith.constant 0 : i32
    return %c0_i32, %c0_i32_0 : i32, i32
  }
  func.func @transform_3(%arg0: i32) -> (i32, i32) {
    %c0_i32 = arith.constant 0 : i32
    %c0_i32_0 = arith.constant 0 : i32
    %c0_i32_1 = arith.constant 0 : i32
    return %c0_i32, %c0_i32_0 : i32, i32
  }
  func.func @transform_4(%arg0: i32) -> (i32, i32) {
    %c0_i32 = arith.constant 0 : i32
    %c0_i32_0 = arith.constant 0 : i32
    %c0_i32_1 = arith.constant 0 : i32
    return %c0_i32, %c0_i32_0 : i32, i32
  }
  func.func @transform_5(%arg0: i32) -> (i32, i32) {
    %c0_i32 = arith.constant 0 : i32
    %c0_i32_0 = arith.constant 0 : i32
    return %arg0, %c0_i32 : i32, i32
  }
  func.func @transform_6(%arg0: i32) -> (i32, i32) {
    %c0_i32 = arith.constant 0 : i32
    %c0_i32_0 = arith.constant 0 : i32
    return %arg0, %c0_i32 : i32, i32
  }
}

module attributes {stable_mosaic.version = 11 : i64} {
  func.func @_mm_bias_relu_kernel(%arg0: i32, %arg1: memref<16x128xbf16, #tpu.memory_space<vmem>>, %arg2: memref<128x128xbf16, #tpu.memory_space<vmem>>, %arg3: memref<1x128xf32, #tpu.memory_space<vmem>>, %arg4: memref<16x128xbf16, #tpu.memory_space<vmem>>) attributes {dimension_semantics = [#tpu.dimension_semantics<parallel>], iteration_bounds = array<i64: 2>, scalar_prefetch = 0 : i64, scratch_operands = 0 : i64, tpu.core_type = #tpu.core_type<tc>, window_params = [{transform_indices = @transform_0, window_bounds = array<i64: 16, 128>}, {pipeline_mode = #tpu.pipeline_mode<synchronous>, transform_indices = @transform_1, window_bounds = array<i64: 128, 128>}, {pipeline_mode = #tpu.pipeline_mode<synchronous>, transform_indices = @transform_2, window_bounds = array<i64: 1, 128>}, {transform_indices = @transform_3, window_bounds = array<i64: 16, 128>}]} {
    %c0 = arith.constant 0 : index
    %c0_0 = arith.constant 0 : index
    %0 = vector.load %arg1[%c0, %c0_0] : memref<16x128xbf16, #tpu.memory_space<vmem>>, vector<16x128xbf16>
    %c0_1 = arith.constant 0 : index
    %c0_2 = arith.constant 0 : index
    %1 = vector.load %arg2[%c0_1, %c0_2] : memref<128x128xbf16, #tpu.memory_space<vmem>>, vector<128x128xbf16>
    %cst = arith.constant dense<0.000000e+00> : vector<16x128xf32>
    %2 = tpu.matmul %0, %1, %cst {dimension_numbers = #tpu.dot_dimension_numbers<[1], [0], [0], [1], [0, 0, 1, 1], [], []>} : vector<16x128xbf16>, vector<128x128xbf16>, vector<16x128xf32> -> vector<16x128xf32>
    %c0_3 = arith.constant 0 : index
    %c0_4 = arith.constant 0 : index
    %3 = vector.load %arg3[%c0_3, %c0_4] : memref<1x128xf32, #tpu.memory_space<vmem>>, vector<1x128xf32>
    %4 = vector.broadcast %3 : vector<1x128xf32> to vector<16x128xf32>
    %5 = arith.addf %2, %4 : vector<16x128xf32>
    %cst_5 = arith.constant 0.000000e+00 : f32
    %6 = vector.broadcast %cst_5 : f32 to vector<16x128xf32>
    %7 = arith.maximumf %5, %6 : vector<16x128xf32>
    %8 = arith.truncf %7 : vector<16x128xf32> to vector<16x128xbf16>
    %c0_6 = arith.constant 0 : index
    %c0_7 = arith.constant 0 : index
    %9 = vector.load %arg4[%c0_6, %c0_7] : memref<16x128xbf16, #tpu.memory_space<vmem>>, vector<16x128xbf16>
    tpu.vector_store %arg4[%c0_6, %c0_7], %8 {strides = array<i32>} : memref<16x128xbf16, #tpu.memory_space<vmem>>, vector<16x128xbf16>,
    return
  }
  func.func @transform_0(%arg0: i32) -> (i32, i32) {
    %c0_i32 = arith.constant 0 : i32
    %c0_i32_0 = arith.constant 0 : i32
    return %arg0, %c0_i32 : i32, i32
  }
  func.func @transform_1(%arg0: i32) -> (i32, i32) {
    %c0_i32 = arith.constant 0 : i32
    %c0_i32_0 = arith.constant 0 : i32
    %c0_i32_1 = arith.constant 0 : i32
    return %c0_i32, %c0_i32_0 : i32, i32
  }
  func.func @transform_2(%arg0: i32) -> (i32, i32) {
    %c0_i32 = arith.constant 0 : i32
    %c0_i32_0 = arith.constant 0 : i32
    %c0_i32_1 = arith.constant 0 : i32
    return %c0_i32, %c0_i32_0 : i32, i32
  }
  func.func @transform_3(%arg0: i32) -> (i32, i32) {
    %c0_i32 = arith.constant 0 : i32
    %c0_i32_0 = arith.constant 0 : i32
    return %arg0, %c0_i32 : i32, i32
  }
}

module attributes {stable_mosaic.version = 11 : i64} {
  func.func @_maxpool_kernel(%arg0: i32, %arg1: memref<3x8x80xbf16, #tpu.memory_space<vmem>>, %arg2: memref<3x8x64xbf16, #tpu.memory_space<vmem>>, %arg3: memref<8x64xbf16, #tpu.memory_space<vmem>>) attributes {dimension_semantics = [#tpu.dimension_semantics<parallel>], iteration_bounds = array<i64: 1>, scalar_prefetch = 0 : i64, scratch_operands = 0 : i64, tpu.core_type = #tpu.core_type<tc>, window_params = [{transform_indices = @transform_0, window_bounds = array<i64: 3, 8, 80>}, {transform_indices = @transform_1, window_bounds = array<i64: 3, 8, 64>}, {transform_indices = @transform_2, window_bounds = array<i64: 8, 64>}]} {
    %c0 = arith.constant 0 : index
    %c0_0 = arith.constant 0 : index
    %c0_1 = arith.constant 0 : index
    %0 = vector.load %arg1[%c0, %c0_0, %c0_1] : memref<3x8x80xbf16, #tpu.memory_space<vmem>>, vector<3x8x80xbf16>
    %cst = arith.constant dense<0xFF80> : vector<8x80xbf16>
    %1 = vector.multi_reduction <maximumf>, %0, %cst [0] : vector<3x8x80xbf16> to vector<8x80xbf16>
    %c0_2 = arith.constant 0 : index
    %c0_3 = arith.constant 0 : index
    %c0_4 = arith.constant 0 : index
    %2 = vector.load %arg2[%c0_2, %c0_3, %c0_4] : memref<3x8x64xbf16, #tpu.memory_space<vmem>>, vector<3x8x64xbf16>
    %cst_5 = arith.constant dense<0xFF80> : vector<8x64xbf16>
    %3 = vector.multi_reduction <maximumf>, %2, %cst_5 [0] : vector<3x8x64xbf16> to vector<8x64xbf16>
    %4 = vector.extract_strided_slice %1 {offsets = [0, 0], sizes = [8, 64], strides = [1, 1]} : vector<8x80xbf16> to vector<8x64xbf16>
    %5 = vector.extract_strided_slice %1 {offsets = [0, 16], sizes = [8, 64], strides = [1, 1]} : vector<8x80xbf16> to vector<8x64xbf16>
    %6 = arith.maximumf %4, %5 : vector<8x64xbf16>
    %7 = arith.maximumf %6, %3 : vector<8x64xbf16>
    %c0_6 = arith.constant 0 : index
    %c0_7 = arith.constant 0 : index
    %8 = vector.load %arg3[%c0_6, %c0_7] : memref<8x64xbf16, #tpu.memory_space<vmem>>, vector<8x64xbf16>
    tpu.vector_store %arg3[%c0_6, %c0_7], %7 {strides = array<i32>} : memref<8x64xbf16, #tpu.memory_space<vmem>>, vector<8x64xbf16>,
    return
  }
  func.func @transform_0(%arg0: i32) -> (i32, i32, i32) {
    %c0_i32 = arith.constant 0 : i32
    %c0_i32_0 = arith.constant 0 : i32
    %c0_i32_1 = arith.constant 0 : i32
    return %c0_i32, %arg0, %c0_i32_0 : i32, i32, i32
  }
  func.func @transform_1(%arg0: i32) -> (i32, i32, i32) {
    %c0_i32 = arith.constant 0 : i32
    %c0_i32_0 = arith.constant 0 : i32
    %c0_i32_1 = arith.constant 0 : i32
    return %c0_i32, %arg0, %c0_i32_0 : i32, i32, i32
  }
  func.func @transform_2(%arg0: i32) -> (i32, i32) {
    %c0_i32 = arith.constant 0 : i32
    %c0_i32_0 = arith.constant 0 : i32
    return %arg0, %c0_i32 : i32, i32
  }
}

module attributes {stable_mosaic.version = 11 : i64} {
  func.func @_mm_bias_relu_kernel(%arg0: i32, %arg1: memref<16x384xbf16, #tpu.memory_space<vmem>>, %arg2: memref<384x128xbf16, #tpu.memory_space<vmem>>, %arg3: memref<1x128xf32, #tpu.memory_space<vmem>>, %arg4: memref<16x128xf32, #tpu.memory_space<vmem>>) attributes {dimension_semantics = [#tpu.dimension_semantics<parallel>], iteration_bounds = array<i64: 2>, scalar_prefetch = 0 : i64, scratch_operands = 0 : i64, tpu.core_type = #tpu.core_type<tc>, window_params = [{transform_indices = @transform_0, window_bounds = array<i64: 16, 384>}, {pipeline_mode = #tpu.pipeline_mode<synchronous>, transform_indices = @transform_1, window_bounds = array<i64: 384, 128>}, {pipeline_mode = #tpu.pipeline_mode<synchronous>, transform_indices = @transform_2, window_bounds = array<i64: 1, 128>}, {transform_indices = @transform_3, window_bounds = array<i64: 16, 128>}]} {
    %c0 = arith.constant 0 : index
    %c0_0 = arith.constant 0 : index
    %0 = vector.load %arg1[%c0, %c0_0] : memref<16x384xbf16, #tpu.memory_space<vmem>>, vector<16x384xbf16>
    %c0_1 = arith.constant 0 : index
    %c0_2 = arith.constant 0 : index
    %1 = vector.load %arg2[%c0_1, %c0_2] : memref<384x128xbf16, #tpu.memory_space<vmem>>, vector<384x128xbf16>
    %cst = arith.constant dense<0.000000e+00> : vector<16x128xf32>
    %2 = tpu.matmul %0, %1, %cst {dimension_numbers = #tpu.dot_dimension_numbers<[1], [0], [0], [1], [0, 0, 1, 1], [], []>} : vector<16x384xbf16>, vector<384x128xbf16>, vector<16x128xf32> -> vector<16x128xf32>
    %c0_3 = arith.constant 0 : index
    %c0_4 = arith.constant 0 : index
    %3 = vector.load %arg3[%c0_3, %c0_4] : memref<1x128xf32, #tpu.memory_space<vmem>>, vector<1x128xf32>
    %4 = vector.broadcast %3 : vector<1x128xf32> to vector<16x128xf32>
    %5 = arith.addf %2, %4 : vector<16x128xf32>
    %cst_5 = arith.constant 0.000000e+00 : f32
    %6 = vector.broadcast %cst_5 : f32 to vector<16x128xf32>
    %7 = arith.maximumf %5, %6 : vector<16x128xf32>
    %c0_6 = arith.constant 0 : index
    %c0_7 = arith.constant 0 : index
    %8 = vector.load %arg4[%c0_6, %c0_7] : memref<16x128xf32, #tpu.memory_space<vmem>>, vector<16x128xf32>
    tpu.vector_store %arg4[%c0_6, %c0_7], %7 {strides = array<i32>} : memref<16x128xf32, #tpu.memory_space<vmem>>, vector<16x128xf32>,
    return
  }
  func.func @transform_0(%arg0: i32) -> (i32, i32) {
    %c0_i32 = arith.constant 0 : i32
    %c0_i32_0 = arith.constant 0 : i32
    return %arg0, %c0_i32 : i32, i32
  }
  func.func @transform_1(%arg0: i32) -> (i32, i32) {
    %c0_i32 = arith.constant 0 : i32
    %c0_i32_0 = arith.constant 0 : i32
    %c0_i32_1 = arith.constant 0 : i32
    return %c0_i32, %c0_i32_0 : i32, i32
  }
  func.func @transform_2(%arg0: i32) -> (i32, i32) {
    %c0_i32 = arith.constant 0 : i32
    %c0_i32_0 = arith.constant 0 : i32
    %c0_i32_1 = arith.constant 0 : i32
    return %c0_i32, %c0_i32_0 : i32, i32
  }
  func.func @transform_3(%arg0: i32) -> (i32, i32) {
    %c0_i32 = arith.constant 0 : i32
    %c0_i32_0 = arith.constant 0 : i32
    return %arg0, %c0_i32 : i32, i32
  }
}

</mosaic_0001>

<llo_original>
// kernel: _lambda_.5
$region0: #{_lambda_.5}
  #allocation0 [shape = 'u32[]', space=smem, size = 0x4, offset = 0x4, fixed_abs, tag = 'smem constant byte address 0x4 - core index']
  #allocation1 [shape = 'u32[144,128]{1,0:T(1,128)}', space=vmem, size = 0x12000, scoped, tag = 'internal scratch']
  %s0 = inlined_call_operand.vmem [shape: bf16[32,128], index: 0, kind: input, shape index: {}]
  %s1 = inlined_call_operand.vmem [shape: bf16[128,128], index: 1, kind: input, shape index: {}]
  %s2 = inlined_call_operand.vmem [shape: f32[1,128], index: 2, kind: input, shape index: {}]
  %s3 = inlined_call_operand.vmem [shape: bf16[32,128], index: 3, kind: output, shape index: {}]
  %s4 = sld [smem:[#allocation0]]
  $region45: #{_lambda_.5} parent=0
    _
  %s6 = ssub.s32 1, %s4
  %s7 = scalar_select 0, %s6, %s4
  loop: start=0, step=1, limit=4
  $region2: #{_lambda_.5} parent=0 // loop_pre_header
    _
  $region3: #{_lambda_.5} parent=0 // loop_header
    %s9 = sphi 0, %s13
    %p10 = scmp.ge.s32.totalorder %s9, 4
    %s19 = sphi 0, %s21
    %s22 = sphi 0, %s19
    %s23 = sphi 0, %s22
    %s39 = sphi 0, %s23
    %s43 = sphi 0, %s43
    %s45 = sphi 0, %s43
    %s46 = sphi 0, %s45
    %s60 = sphi 0, %s46
    %s64 = sphi 0, %s64
    %s66 = sphi 0, %s64
    %s67 = sphi 0, %s66
    %s81 = sphi 0, %s67
    %s87 = sphi 0, %s89
    %s90 = sphi 0, %s87
    %s91 = sphi 0, %s90
    %s107 = sphi 0, %s91
  $region4: #{_lambda_.5} parent=0 // loop_header_branch
    %12 = sbr.rel (%p10) target = $region8
  $region5: #{_lambda_.5} parent=0 // loop_body
    %s14 = ssub.s32 %s9, 1
    %s15 = ssub.s32 %s9, 2
    %s16 = sadd.s32 %s9, 1
    %s17 = ssub.s32 %s9, %s16
    %p18 = scmp.eq.s32.totalorder %s17, 0
    %s20 = sadd.s32 %s19, 1
    %s21 = scalar_select %p18, %s19, %s20
    %p24 = pneg %p18
    %p25 = scmp.eq.s32.totalorder %s9, 1
    %p26 = por %p24, %p25
    %p27 = scmp.ne.s32.totalorder %s19, %s22
    %p28 = scmp.eq.s32.totalorder %s9, 0
    %p29 = por %p27, %p28
    %p30 = scmp.ne.s32.totalorder %s19, %s22
    %p31 = scmp.eq.s32.totalorder %s14, 1
    %p32 = por %p30, %p31
    %p33 = scmp.ne.s32.totalorder %s22, %s23
    %p34 = scmp.eq.s32.totalorder %s14, 0
    %p35 = por %p33, %p34
    %p36 = scmp.ne.s32.totalorder %s22, %s23
    %p37 = scmp.eq.s32.totalorder %s15, 1
    %p38 = por %p36, %p37
    %p40 = scmp.ne.s32.totalorder %s23, %s39
    %p41 = scmp.eq.s32.totalorder %s15, 0
    %p42 = por %p40, %p41
    %s44 = sadd.s32 %s43, 1
    %p47 = scmp.eq.s32.totalorder %s9, 1
    %p48 = scmp.ne.s32.totalorder %s43, %s45
    %p49 = scmp.eq.s32.totalorder %s9, 0
    %p50 = por %p48, %p49
    %p51 = scmp.ne.s32.totalorder %s43, %s45
    %p52 = scmp.eq.s32.totalorder %s14, 1
    %p53 = por %p51, %p52
    %p54 = scmp.ne.s32.totalorder %s45, %s46
    %p55 = scmp.eq.s32.totalorder %s14, 0
    %p56 = por %p54, %p55
    %p57 = scmp.ne.s32.totalorder %s45, %s46
    %p58 = scmp.eq.s32.totalorder %s15, 1
    %p59 = por %p57, %p58
    %p61 = scmp.ne.s32.totalorder %s46, %s60
    %p62 = scmp.eq.s32.totalorder %s15, 0
    %p63 = por %p61, %p62
    %s65 = sadd.s32 %s64, 1
    %p68 = scmp.eq.s32.totalorder %s9, 1
    %p69 = scmp.ne.s32.totalorder %s64, %s66
    %p70 = scmp.eq.s32.totalorder %s9, 0
    %p71 = por %p69, %p70
    %p72 = scmp.ne.s32.totalorder %s64, %s66
    %p73 = scmp.eq.s32.totalorder %s14, 1
    %p74 = por %p72, %p73
    %p75 = scmp.ne.s32.totalorder %s66, %s67
    %p76 = scmp.eq.s32.totalorder %s14, 0
    %p77 = por %p75, %p76
    %p78 = scmp.ne.s32.totalorder %s66, %s67
    %p79 = scmp.eq.s32.totalorder %s15, 1
    %p80 = por %p78, %p79
    %p82 = scmp.ne.s32.totalorder %s67, %s81
    %p83 = scmp.eq.s32.totalorder %s15, 0
    %p84 = por %p82, %p83
    %s85 = ssub.s32 %s9, %s16
    %p86 = scmp.eq.s32.totalorder %s85, 0
    %s88 = sadd.s32 %s87, 1
    %s89 = scalar_select %p86, %s87, %s88
    %p92 = pneg %p86
    %p93 = scmp.eq.s32.totalorder %s9, 1
    %p94 = por %p92, %p93
    %p95 = scmp.ne.s32.totalorder %s87, %s90
    %p96 = scmp.eq.s32.totalorder %s9, 0
    %p97 = por %p95, %p96
    %p98 = scmp.ne.s32.totalorder %s87, %s90
    %p99 = scmp.eq.s32.totalorder %s14, 1
    %p100 = por %p98, %p99
    %p101 = scmp.ne.s32.totalorder %s90, %s91
    %p102 = scmp.eq.s32.totalorder %s14, 0
    %p103 = por %p101, %p102
    %p104 = scmp.ne.s32.totalorder %s90, %s91
    %p105 = scmp.eq.s32.totalorder %s15, 1
    %p106 = por %p104, %p105
    %p108 = scmp.ne.s32.totalorder %s91, %s107
    %p109 = scmp.eq.s32.totalorder %s15, 0
    %p110 = por %p108, %p109
    %p111 = scmp.le.s32.totalorder 1, %s9
    %p112 = scmp.lt.s32.totalorder %s9, 3
    %p113 = pnand %p111, %p112
    %p114 = pneg %p113
    // Predicated region
    $region9: #{_lambda_.5} parent=5 // pred_check
      _
    $region10: #{_lambda_.5} parent=5 // pred_check_branch
      %116 = sbr.rel (%p113) target = $region12
    $region11: #{_lambda_.5} parent=5 // pred_region
      %s117 = ssub.s32 %s9, 1
      // Predicated region
      $region13: #{_lambda_.5} parent=11 // pred_check
        %p118 = pneg %p56
      $region14: #{_lambda_.5} parent=11 // pred_check_branch
        %120 = sbr.rel (%p118) target = $region16
      $region15: #{_lambda_.5} parent=11 // pred_region
        _
      $region16: #{_lambda_.5} parent=11 // pred_fallthru
        _
      // Predicated region
      $region17: #{_lambda_.5} parent=11 // pred_check
        %p121 = pneg %p77
      $region18: #{_lambda_.5} parent=11 // pred_check_branch
        %123 = sbr.rel (%p121) target = $region20
      $region19: #{_lambda_.5} parent=11 // pred_region
        _
      $region20: #{_lambda_.5} parent=11 // pred_fallthru
        _
    $region12: #{_lambda_.5} parent=5 // pred_fallthru
      _
    %p124 = scmp.lt.s32.totalorder %s9, 2
    // Predicated region
    $region21: #{_lambda_.5} parent=5 // pred_check
      %p125 = pneg %p124
    $region22: #{_lambda_.5} parent=5 // pred_check_branch
      %127 = sbr.rel (%p125) target = $region24
    $region23: #{_lambda_.5} parent=5 // pred_region
      // Predicated region
      $region25: #{_lambda_.5} parent=23 // pred_check
        %p128 = pneg %p29
      $region26: #{_lambda_.5} parent=23 // pred_check_branch
        %130 = sbr.rel (%p128) target = $region28
      $region27: #{_lambda_.5} parent=23 // pred_region
        %s131 = smul.u32 2, %s9
        %p132 = scmp.lt.s32.totalorder %s131, 3
        %s133 = scalar_select %p132, %s131, 3
        %s134 = smul.addr %s133, 4
        %s135 = scalar_lea.vmem %s0, %s134
        %s136 = smul.u32 2, %s9
      $region28: #{_lambda_.5} parent=23 // pred_fallthru
        _
    $region24: #{_lambda_.5} parent=5 // pred_fallthru
      _
    %p137 = scmp.le.s32.totalorder 1, %s9
    %p138 = scmp.lt.s32.totalorder %s9, 3
    %p139 = pnand %p137, %p138
    %p140 = pneg %p139
    // Predicated region
    $region29: #{_lambda_.5} parent=5 // pred_check
      _
    $region30: #{_lambda_.5} parent=5 // pred_check_branch
      %142 = sbr.rel (%p139) target = $region32
    $region31: #{_lambda_.5} parent=5 // pred_region
      %s143 = ssub.s32 %s9, 1
      %s144 = smul.u32 2, %s14
      %p145 = scmp.lt.s32.totalorder %s144, 3
      %s146 = scalar_select %p145, %s144, 3
      %s147 = smul.addr %s146, 4
      %s148 = scalar_lea.vmem %s0, %s147
      %p149 = pneg %p35
      %p150 = pneg %p32
      %p151 = pneg %p56
      %p152 = pneg %p53
      %p153 = pneg %p77
      %p154 = pneg %p74
      %p155 = pneg %p103
      %p156 = pneg %p100
      %s157 = smul.u32 2, %s14
      %p158 = scmp.lt.s32.totalorder %s157, 3
      %s159 = scalar_select %p158, %s157, 3
      %s160 = smul.addr %s159, 4
      %s161 = scalar_lea.vmem %s3, %s160
      %s162 = smul.u32 2, %s14
      %p163 = scmp.lt.s32.totalorder %s162, 3
      %s164 = scalar_select %p163, %s162, 3
      %s165 = smul.addr %s164, 4
      %s166 = scalar_lea.vmem %s0, %s165
      %s167 = smul.u32 2, %s14
      %s168 = smul.u32 2, %s14
      %p169 = scmp.lt.s32.totalorder %s168, 3
      %s170 = scalar_select %p169, %s168, 3
      %s171 = smul.addr %s170, 4
      %s172 = scalar_lea.vmem %s3, %s171
      %s173 = smul.u32 2, %s14
      %v175 = vld [vmem:[%s166] sm:$0xf]
      %v176 = vld [vmem:[%s166 + $0x4] sm:$0xf]
      %v177 = vld [vmem:[%s1] sm:$0xf]
      %v178 = vld [vmem:[%s1 + $0x4] sm:$0xf]
      %v179 = vld [vmem:[%s1 + $0x8] sm:$0xf]
      %v180 = vld [vmem:[%s1 + $0xc] sm:$0xf]
      %v181 = vld [vmem:[%s1 + $0x10] sm:$0xf]
      %v182 = vld [vmem:[%s1 + $0x14] sm:$0xf]
      %v183 = vld [vmem:[%s1 + $0x18] sm:$0xf]
      %v184 = vld [vmem:[%s1 + $0x1c] sm:$0xf]
      %v185 = vld [vmem:[%s1 + $0x20] sm:$0xf]
      %v186 = vld [vmem:[%s1 + $0x24] sm:$0xf]
      %v187 = vld [vmem:[%s1 + $0x28] sm:$0xf]
      %v188 = vld [vmem:[%s1 + $0x2c] sm:$0xf]
      %v189 = vld [vmem:[%s1 + $0x30] sm:$0xf]
      %v190 = vld [vmem:[%s1 + $0x34] sm:$0xf]
      %v191 = vld [vmem:[%s1 + $0x38] sm:$0xf]
      %v192 = vld [vmem:[%s1 + $0x3c] sm:$0xf]
      %v193 = vld [vmem:[%s2] sm:$0x1]
      %v195 = vlaneseq
      %v196 = vshrl.u32 %v195, 7
      %v197 = vsub.s32 0, %v196
      %v198 = vrot.slane %v193, %v197
      %v202 = vunpack.c.l.b16 %v175
      %v203 = vunpack.c.l.b16 %v176
      %v204 = vpack.c.b16 %v203, %v202
      %v222 = vunpack.c.l.b16 %v177
      %v223 = vunpack.c.l.b16 %v178
      %v224 = vunpack.c.l.b16 %v179
      %v225 = vunpack.c.l.b16 %v180
      %v226 = vunpack.c.l.b16 %v181
      %v227 = vunpack.c.l.b16 %v182
      %v228 = vunpack.c.l.b16 %v183
      %v229 = vunpack.c.l.b16 %v184
      %v230 = vunpack.c.l.b16 %v185
      %v231 = vunpack.c.l.b16 %v186
      %v232 = vunpack.c.l.b16 %v187
      %v233 = vunpack.c.l.b16 %v188
      %v234 = vunpack.c.l.b16 %v189
      %v235 = vunpack.c.l.b16 %v190
      %v236 = vunpack.c.l.b16 %v191
      %v237 = vunpack.c.l.b16 %v192
      %v238 = vpack.c.b16 %v223, %v222
      %v239 = vpack.c.b16 %v225, %v224
      %v240 = vpack.c.b16 %v227, %v226
      %v241 = vpack.c.b16 %v229, %v228
      %v242 = vpack.c.b16 %v231, %v230
      %v243 = vpack.c.b16 %v233, %v232
      %v244 = vpack.c.b16 %v235, %v234
      %v245 = vpack.c.b16 %v237, %v236
      %254 = vmatprep.subr.bf16.mxu0 0
      %255 = vmatpush1.bf16.msra.mxu0 %v238
      %256 = vmatprep.subr.bf16.mxu0 0
      %257 = vmatpush1.bf16.msra.mxu0 %v239
      %258 = vmatprep.subr.bf16.mxu0 0
      %259 = vmatpush1.bf16.msra.mxu0 %v240
      %260 = vmatprep.subr.bf16.mxu0 0
      %261 = vmatpush1.bf16.msra.mxu0 %v241
      %262 = vmatprep.subr.bf16.mxu0 0
      %263 = vmatpush1.bf16.msra.mxu0 %v242
      %264 = vmatprep.subr.bf16.mxu0 0
      %265 = vmatpush1.bf16.msra.mxu0 %v243
      %266 = vmatprep.subr.bf16.mxu0 0
      %267 = vmatpush1.bf16.msra.mxu0 %v244
      %268 = vmatprep.subr.bf16.mxu0 0
      %269 = vmatpush1.bf16.msra.mxu0 %v245
      %270 = vmatprep.subr.bf16.mxu0 0
      %271 = vmatpush1.bf16.msra.mxu0 0
      %272 = vmatprep.subr.bf16.mxu0 0
      %273 = vmatpush1.bf16.msra.mxu0 0
      %274 = vmatprep.subr.bf16.mxu0 0
      %275 = vmatpush1.bf16.msra.mxu0 0
      %276 = vmatprep.subr.bf16.mxu0 0
      %277 = vmatpush1.bf16.msra.mxu0 0
      %278 = vmatprep.subr.bf16.mxu0 0
      %279 = vmatpush1.bf16.msra.mxu0 0
      %280 = vmatprep.subr.bf16.mxu0 0
      %281 = vmatpush1.bf16.msra.mxu0 0
      %282 = vmatprep.subr.bf16.mxu0 0
      %283 = vmatpush1.bf16.msra.mxu0 0
      %284 = vmatprep.subr.bf16.mxu0 0
      %285 = vmatpush1.bf16.msra.mxu0 0
      %286 = vmatprep.mubr.bf16.mxu0 0
      %287 = vmatmul.mubr.bf16.gmra.mrb[0].mxu0 %v204
      %v288 = vpop.f32.mrb[0].mxu0
      %v289 = vadd.f32 %v198, %v288
      %v290 = vpop.f32.mrb[0].mxu0
      %v291 = vpop.f32.mrb[0].mxu0
      %v292 = vadd.f32 %v198, %v291
      %v293 = vpop.f32.mrb[0].mxu0
      %294 = vdwg.mxu0
      %v295 = vmax.f32 %v289, 0.0
      %v296 = vmax.f32 %v292, 0.0
      %v297 = vpack.c.bf16 %v296, %v295
      %v299 = vunpack.c.l.b16 %v297
      %v300 = vunpack.c.h.b16 %v297
      %v301 = vpack.c.b16 %v299, %v299
      %v302 = vpack.c.b16 %v300, %v300
      %305 = vst [vmem:[%s172] sm:$0xf] %v301
      %306 = vst [vmem:[%s172 + $0x4] sm:$0xf] %v302
      %s307 = smul.u32 2, %s14
      %p308 = scmp.lt.s32.totalorder %s307, 3
      %s309 = scalar_select %p308, %s307, 3
      %s310 = smul.addr %s309, 4
      %s311 = scalar_lea.vmem %s3, %s310
      // Predicated region
      $region33: #{_lambda_.5} parent=31 // pred_check
        %p312 = pneg %p100
      $region34: #{_lambda_.5} parent=31 // pred_check_branch
        %314 = sbr.rel (%p312) target = $region36
      $region35: #{_lambda_.5} parent=31 // pred_region
        %s315 = smul.u32 2, %s14
      $region36: #{_lambda_.5} parent=31 // pred_fallthru
        _
    $region32: #{_lambda_.5} parent=5 // pred_fallthru
      _
    %p316 = scmp.le.s32.totalorder 2, %s9
    // Predicated region
    $region37: #{_lambda_.5} parent=5 // pred_check
      %p317 = pneg %p316
    $region38: #{_lambda_.5} parent=5 // pred_check_branch
      %319 = sbr.rel (%p317) target = $region40
    $region39: #{_lambda_.5} parent=5 // pred_region
      %s320 = ssub.s32 %s9, 2
      // Predicated region
      $region41: #{_lambda_.5} parent=39 // pred_check
        %p321 = pneg %p106
      $region42: #{_lambda_.5} parent=39 // pred_check_branch
        %323 = sbr.rel (%p321) target = $region44
      $region43: #{_lambda_.5} parent=39 // pred_region
        %s324 = smul.u32 2, %s15
        %p325 = scmp.lt.s32.totalorder %s324, 3
        %s326 = scalar_select %p325, %s324, 3
        %s327 = smul.addr %s326, 4
        %s328 = scalar_lea.vmem %s3, %s327
      $region44: #{_lambda_.5} parent=39 // pred_fallthru
        _
    $region40: #{_lambda_.5} parent=5 // pred_fallthru
      _
  $region6: #{_lambda_.5} parent=0 // loop_footer
    %s13 = sadd.s32 1, %s9
  $region7: #{_lambda_.5} parent=0 // loop_footer_branch
    %8 = sbr.rel target = $region3
  $region8: #{_lambda_.5} parent=0 // loop_exit
    _

// kernel: _lambda_.4
$region0: #{_lambda_.4}
  #allocation0 [shape = 'u32[]', space=smem, size = 0x4, offset = 0x4, fixed_abs, tag = 'smem constant byte address 0x4 - core index']
  #allocation1 [shape = 'u32[144,128]{1,0:T(1,128)}', space=vmem, size = 0x12000, scoped, tag = 'internal scratch']
  %s0 = inlined_call_operand.vmem [shape: bf16[128,128], index: 0, kind: input, shape index: {}]
  %s1 = inlined_call_operand.vmem [shape: bf16[128,128], index: 1, kind: input, shape index: {}]
  %s2 = inlined_call_operand.vmem [shape: f32[1,128], index: 2, kind: input, shape index: {}]
  %s3 = inlined_call_operand.vmem [shape: bf16[128,128], index: 3, kind: input, shape index: {}]
  %s4 = inlined_call_operand.vmem [shape: f32[1,128], index: 4, kind: input, shape index: {}]
  %s5 = inlined_call_operand.vmem [shape: bf16[128,128], index: 5, kind: output, shape index: {0}]
  %s6 = inlined_call_operand.vmem [shape: bf16[128,128], index: 6, kind: output, shape index: {1}]
  %7 = xla_tuple %s5, %s6
  %s8 = sld [smem:[#allocation0]]
  $region61: #{_lambda_.4} parent=0
    _
  %s10 = ssub.s32 1, %s8
  %s11 = scalar_select 0, %s10, %s8
  loop: start=0, step=1, limit=4
  $region2: #{_lambda_.4} parent=0 // loop_pre_header
    _
  $region3: #{_lambda_.4} parent=0 // loop_header
    %s13 = sphi 0, %s17
    %p14 = scmp.ge.s32.totalorder %s13, 4
    %s23 = sphi 0, %s25
    %s26 = sphi 0, %s23
    %s27 = sphi 0, %s26
    %s43 = sphi 0, %s27
    %s47 = sphi 0, %s47
    %s49 = sphi 0, %s47
    %s50 = sphi 0, %s49
    %s64 = sphi 0, %s50
    %s68 = sphi 0, %s68
    %s70 = sphi 0, %s68
    %s71 = sphi 0, %s70
    %s85 = sphi 0, %s71
    %s89 = sphi 0, %s89
    %s91 = sphi 0, %s89
    %s92 = sphi 0, %s91
    %s106 = sphi 0, %s92
    %s110 = sphi 0, %s110
    %s112 = sphi 0, %s110
    %s113 = sphi 0, %s112
    %s127 = sphi 0, %s113
    %s133 = sphi 0, %s135
    %s136 = sphi 0, %s133
    %s137 = sphi 0, %s136
    %s153 = sphi 0, %s137
    %s159 = sphi 0, %s161
    %s162 = sphi 0, %s159
    %s163 = sphi 0, %s162
    %s179 = sphi 0, %s163
  $region4: #{_lambda_.4} parent=0 // loop_header_branch
    %16 = sbr.rel (%p14) target = $region8
  $region5: #{_lambda_.4} parent=0 // loop_body
    %s18 = ssub.s32 %s13, 1
    %s19 = ssub.s32 %s13, 2
    %s20 = sadd.s32 %s13, 1
    %s21 = ssub.s32 %s13, %s20
    %p22 = scmp.eq.s32.totalorder %s21, 0
    %s24 = sadd.s32 %s23, 1
    %s25 = scalar_select %p22, %s23, %s24
    %p28 = pneg %p22
    %p29 = scmp.eq.s32.totalorder %s13, 1
    %p30 = por %p28, %p29
    %p31 = scmp.ne.s32.totalorder %s23, %s26
    %p32 = scmp.eq.s32.totalorder %s13, 0
    %p33 = por %p31, %p32
    %p34 = scmp.ne.s32.totalorder %s23, %s26
    %p35 = scmp.eq.s32.totalorder %s18, 1
    %p36 = por %p34, %p35
    %p37 = scmp.ne.s32.totalorder %s26, %s27
    %p38 = scmp.eq.s32.totalorder %s18, 0
    %p39 = por %p37, %p38
    %p40 = scmp.ne.s32.totalorder %s26, %s27
    %p41 = scmp.eq.s32.totalorder %s19, 1
    %p42 = por %p40, %p41
    %p44 = scmp.ne.s32.totalorder %s27, %s43
    %p45 = scmp.eq.s32.totalorder %s19, 0
    %p46 = por %p44, %p45
    %s48 = sadd.s32 %s47, 1
    %p51 = scmp.eq.s32.totalorder %s13, 1
    %p52 = scmp.ne.s32.totalorder %s47, %s49
    %p53 = scmp.eq.s32.totalorder %s13, 0
    %p54 = por %p52, %p53
    %p55 = scmp.ne.s32.totalorder %s47, %s49
    %p56 = scmp.eq.s32.totalorder %s18, 1
    %p57 = por %p55, %p56
    %p58 = scmp.ne.s32.totalorder %s49, %s50
    %p59 = scmp.eq.s32.totalorder %s18, 0
    %p60 = por %p58, %p59
    %p61 = scmp.ne.s32.totalorder %s49, %s50
    %p62 = scmp.eq.s32.totalorder %s19, 1
    %p63 = por %p61, %p62
    %p65 = scmp.ne.s32.totalorder %s50, %s64
    %p66 = scmp.eq.s32.totalorder %s19, 0
    %p67 = por %p65, %p66
    %s69 = sadd.s32 %s68, 1
    %p72 = scmp.eq.s32.totalorder %s13, 1
    %p73 = scmp.ne.s32.totalorder %s68, %s70
    %p74 = scmp.eq.s32.totalorder %s13, 0
    %p75 = por %p73, %p74
    %p76 = scmp.ne.s32.totalorder %s68, %s70
    %p77 = scmp.eq.s32.totalorder %s18, 1
    %p78 = por %p76, %p77
    %p79 = scmp.ne.s32.totalorder %s70, %s71
    %p80 = scmp.eq.s32.totalorder %s18, 0
    %p81 = por %p79, %p80
    %p82 = scmp.ne.s32.totalorder %s70, %s71
    %p83 = scmp.eq.s32.totalorder %s19, 1
    %p84 = por %p82, %p83
    %p86 = scmp.ne.s32.totalorder %s71, %s85
    %p87 = scmp.eq.s32.totalorder %s19, 0
    %p88 = por %p86, %p87
    %s90 = sadd.s32 %s89, 1
    %p93 = scmp.eq.s32.totalorder %s13, 1
    %p94 = scmp.ne.s32.totalorder %s89, %s91
    %p95 = scmp.eq.s32.totalorder %s13, 0
    %p96 = por %p94, %p95
    %p97 = scmp.ne.s32.totalorder %s89, %s91
    %p98 = scmp.eq.s32.totalorder %s18, 1
    %p99 = por %p97, %p98
    %p100 = scmp.ne.s32.totalorder %s91, %s92
    %p101 = scmp.eq.s32.totalorder %s18, 0
    %p102 = por %p100, %p101
    %p103 = scmp.ne.s32.totalorder %s91, %s92
    %p104 = scmp.eq.s32.totalorder %s19, 1
    %p105 = por %p103, %p104
    %p107 = scmp.ne.s32.totalorder %s92, %s106
    %p108 = scmp.eq.s32.totalorder %s19, 0
    %p109 = por %p107, %p108
    %s111 = sadd.s32 %s110, 1
    %p114 = scmp.eq.s32.totalorder %s13, 1
    %p115 = scmp.ne.s32.totalorder %s110, %s112
    %p116 = scmp.eq.s32.totalorder %s13, 0
    %p117 = por %p115, %p116
    %p118 = scmp.ne.s32.totalorder %s110, %s112
    %p119 = scmp.eq.s32.totalorder %s18, 1
    %p120 = por %p118, %p119
    %p121 = scmp.ne.s32.totalorder %s112, %s113
    %p122 = scmp.eq.s32.totalorder %s18, 0
    %p123 = por %p121, %p122
    %p124 = scmp.ne.s32.totalorder %s112, %s113
    %p125 = scmp.eq.s32.totalorder %s19, 1
    %p126 = por %p124, %p125
    %p128 = scmp.ne.s32.totalorder %s113, %s127
    %p129 = scmp.eq.s32.totalorder %s19, 0
    %p130 = por %p128, %p129
    %s131 = ssub.s32 %s13, %s20
    %p132 = scmp.eq.s32.totalorder %s131, 0
    %s134 = sadd.s32 %s133, 1
    %s135 = scalar_select %p132, %s133, %s134
    %p138 = pneg %p132
    %p139 = scmp.eq.s32.totalorder %s13, 1
    %p140 = por %p138, %p139
    %p141 = scmp.ne.s32.totalorder %s133, %s136
    %p142 = scmp.eq.s32.totalorder %s13, 0
    %p143 = por %p141, %p142
    %p144 = scmp.ne.s32.totalorder %s133, %s136
    %p145 = scmp.eq.s32.totalorder %s18, 1
    %p146 = por %p144, %p145
    %p147 = scmp.ne.s32.totalorder %s136, %s137
    %p148 = scmp.eq.s32.totalorder %s18, 0
    %p149 = por %p147, %p148
    %p150 = scmp.ne.s32.totalorder %s136, %s137
    %p151 = scmp.eq.s32.totalorder %s19, 1
    %p152 = por %p150, %p151
    %p154 = scmp.ne.s32.totalorder %s137, %s153
    %p155 = scmp.eq.s32.totalorder %s19, 0
    %p156 = por %p154, %p155
    %s157 = ssub.s32 %s13, %s20
    %p158 = scmp.eq.s32.totalorder %s157, 0
    %s160 = sadd.s32 %s159, 1
    %s161 = scalar_select %p158, %s159, %s160
    %p164 = pneg %p158
    %p165 = scmp.eq.s32.totalorder %s13, 1
    %p166 = por %p164, %p165
    %p167 = scmp.ne.s32.totalorder %s159, %s162
    %p168 = scmp.eq.s32.totalorder %s13, 0
    %p169 = por %p167, %p168
    %p170 = scmp.ne.s32.totalorder %s159, %s162
    %p171 = scmp.eq.s32.totalorder %s18, 1
    %p172 = por %p170, %p171
    %p173 = scmp.ne.s32.totalorder %s162, %s163
    %p174 = scmp.eq.s32.totalorder %s18, 0
    %p175 = por %p173, %p174
    %p176 = scmp.ne.s32.totalorder %s162, %s163
    %p177 = scmp.eq.s32.totalorder %s19, 1
    %p178 = por %p176, %p177
    %p180 = scmp.ne.s32.totalorder %s163, %s179
    %p181 = scmp.eq.s32.totalorder %s19, 0
    %p182 = por %p180, %p181
    %p183 = scmp.le.s32.totalorder 1, %s13
    %p184 = scmp.lt.s32.totalorder %s13, 3
    %p185 = pnand %p183, %p184
    %p186 = pneg %p185
    // Predicated region
    $region9: #{_lambda_.4} parent=5 // pred_check
      _
    $region10: #{_lambda_.4} parent=5 // pred_check_branch
      %188 = sbr.rel (%p185) target = $region12
    $region11: #{_lambda_.4} parent=5 // pred_region
      %s189 = ssub.s32 %s13, 1
      // Predicated region
      $region13: #{_lambda_.4} parent=11 // pred_check
        %p190 = pneg %p60
      $region14: #{_lambda_.4} parent=11 // pred_check_branch
        %192 = sbr.rel (%p190) target = $region16
      $region15: #{_lambda_.4} parent=11 // pred_region
        _
      $region16: #{_lambda_.4} parent=11 // pred_fallthru
        _
      // Predicated region
      $region17: #{_lambda_.4} parent=11 // pred_check
        %p193 = pneg %p81
      $region18: #{_lambda_.4} parent=11 // pred_check_branch
        %195 = sbr.rel (%p193) target = $region20
      $region19: #{_lambda_.4} parent=11 // pred_region
        _
      $region20: #{_lambda_.4} parent=11 // pred_fallthru
        _
      // Predicated region
      $region21: #{_lambda_.4} parent=11 // pred_check
        %p196 = pneg %p102
      $region22: #{_lambda_.4} parent=11 // pred_check_branch
        %198 = sbr.rel (%p196) target = $region24
      $region23: #{_lambda_.4} parent=11 // pred_region
        _
      $region24: #{_lambda_.4} parent=11 // pred_fallthru
        _
      // Predicated region
      $region25: #{_lambda_.4} parent=11 // pred_check
        %p199 = pneg %p123
      $region26: #{_lambda_.4} parent=11 // pred_check_branch
        %201 = sbr.rel (%p199) target = $region28
      $region27: #{_lambda_.4} parent=11 // pred_region
        _
      $region28: #{_lambda_.4} parent=11 // pred_fallthru
        _
    $region12: #{_lambda_.4} parent=5 // pred_fallthru
      _
    %p202 = scmp.lt.s32.totalorder %s13, 2
    // Predicated region
    $region29: #{_lambda_.4} parent=5 // pred_check
      %p203 = pneg %p202
    $region30: #{_lambda_.4} parent=5 // pred_check_branch
      %205 = sbr.rel (%p203) target = $region32
    $region31: #{_lambda_.4} parent=5 // pred_region
      // Predicated region
      $region33: #{_lambda_.4} parent=31 // pred_check
        %p206 = pneg %p33
      $region34: #{_lambda_.4} parent=31 // pred_check_branch
        %208 = sbr.rel (%p206) target = $region36
      $region35: #{_lambda_.4} parent=31 // pred_region
        %s209 = smul.u32 8, %s13
        %p210 = scmp.lt.s32.totalorder %s209, 15
        %s211 = scalar_select %p210, %s209, 15
        %s212 = smul.addr %s211, 4
        %s213 = scalar_lea.vmem %s0, %s212
        %s214 = smul.u32 8, %s13
      $region36: #{_lambda_.4} parent=31 // pred_fallthru
        _
    $region32: #{_lambda_.4} parent=5 // pred_fallthru
      _
    %p215 = scmp.le.s32.totalorder 1, %s13
    %p216 = scmp.lt.s32.totalorder %s13, 3
    %p217 = pnand %p215, %p216
    %p218 = pneg %p217
    // Predicated region
    $region37: #{_lambda_.4} parent=5 // pred_check
      _
    $region38: #{_lambda_.4} parent=5 // pred_check_branch
      %220 = sbr.rel (%p217) target = $region40
    $region39: #{_lambda_.4} parent=5 // pred_region
      %s221 = ssub.s32 %s13, 1
      %s222 = smul.u32 8, %s18
      %p223 = scmp.lt.s32.totalorder %s222, 15
      %s224 = scalar_select %p223, %s222, 15
      %s225 = smul.addr %s224, 4
      %s226 = scalar_lea.vmem %s0, %s225
      %p227 = pneg %p39
      %p228 = pneg %p36
      %p229 = pneg %p60
      %p230 = pneg %p57
      %p231 = pneg %p81
      %p232 = pneg %p78
      %p233 = pneg %p102
      %p234 = pneg %p99
      %p235 = pneg %p123
      %p236 = pneg %p120
      %p237 = pneg %p149
      %p238 = pneg %p146
      %s239 = smul.u32 8, %s18
      %p240 = scmp.lt.s32.totalorder %s239, 15
      %s241 = scalar_select %p240, %s239, 15
      %s242 = smul.addr %s241, 4
      %s243 = scalar_lea.vmem %s5, %s242
      %p244 = pneg %p175
      %p245 = pneg %p172
      %s246 = smul.u32 8, %s18
      %p247 = scmp.lt.s32.totalorder %s246, 15
      %s248 = scalar_select %p247, %s246, 15
      %s249 = smul.addr %s248, 4
      %s250 = scalar_lea.vmem %s6, %s249
      %s251 = smul.u32 8, %s18
      %p252 = scmp.lt.s32.totalorder %s251, 15
      %s253 = scalar_select %p252, %s251, 15
      %s254 = smul.addr %s253, 4
      %s255 = scalar_lea.vmem %s0, %s254
      %s256 = smul.u32 8, %s18
      %s257 = smul.u32 8, %s18
      %p258 = scmp.lt.s32.totalorder %s257, 15
      %s259 = scalar_select %p258, %s257, 15
      %s260 = smul.addr %s259, 4
      %s261 = scalar_lea.vmem %s5, %s260
      %s262 = smul.u32 8, %s18
      %s263 = smul.u32 8, %s18
      %p264 = scmp.lt.s32.totalorder %s263, 15
      %s265 = scalar_select %p264, %s263, 15
      %s266 = smul.addr %s265, 4
      %s267 = scalar_lea.vmem %s6, %s266
      %s268 = smul.u32 8, %s18
      %v270 = vld [vmem:[%s255] sm:$0xf]
      %v271 = vld [vmem:[%s255 + $0x4] sm:$0xf]
      %v272 = vld [vmem:[%s255 + $0x8] sm:$0xf]
      %v273 = vld [vmem:[%s255 + $0xc] sm:$0xf]
      %v274 = vld [vmem:[%s255 + $0x10] sm:$0xf]
      %v275 = vld [vmem:[%s255 + $0x14] sm:$0xf]
      %v276 = vld [vmem:[%s255 + $0x18] sm:$0xf]
      %v277 = vld [vmem:[%s255 + $0x1c] sm:$0xf]
      %v278 = vld [vmem:[%s1] sm:$0xf]
      %v279 = vld [vmem:[%s1 + $0x4] sm:$0xf]
      %v280 = vld [vmem:[%s1 + $0x8] sm:$0xf]
      %v281 = vld [vmem:[%s1 + $0xc] sm:$0xf]
      %v282 = vld [vmem:[%s1 + $0x10] sm:$0xf]
      %v283 = vld [vmem:[%s1 + $0x14] sm:$0xf]
      %v284 = vld [vmem:[%s1 + $0x18] sm:$0xf]
      %v285 = vld [vmem:[%s1 + $0x1c] sm:$0xf]
      %v286 = vld [vmem:[%s1 + $0x20] sm:$0xf]
      %v287 = vld [vmem:[%s1 + $0x24] sm:$0xf]
      %v288 = vld [vmem:[%s1 + $0x28] sm:$0xf]
      %v289 = vld [vmem:[%s1 + $0x2c] sm:$0xf]
      %v290 = vld [vmem:[%s1 + $0x30] sm:$0xf]
      %v291 = vld [vmem:[%s1 + $0x34] sm:$0xf]
      %v292 = vld [vmem:[%s1 + $0x38] sm:$0xf]
      %v293 = vld [vmem:[%s1 + $0x3c] sm:$0xf]
      %v294 = vld [vmem:[%s2] sm:$0x1]
      %v296 = vlaneseq
      %v297 = vshrl.u32 %v296, 7
      %v298 = vsub.s32 0, %v297
      %v299 = vrot.slane %v294, %v298
      %v309 = vunpack.c.l.b16 %v270
      %v310 = vunpack.c.l.b16 %v271
      %v311 = vunpack.c.l.b16 %v272
      %v312 = vunpack.c.l.b16 %v273
      %v313 = vunpack.c.l.b16 %v274
      %v314 = vunpack.c.l.b16 %v275
      %v315 = vunpack.c.l.b16 %v276
      %v316 = vunpack.c.l.b16 %v277
      %v317 = vpack.c.b16 %v310, %v309
      %v318 = vpack.c.b16 %v312, %v311
      %v319 = vpack.c.b16 %v314, %v313
      %v320 = vpack.c.b16 %v316, %v315
      %v341 = vunpack.c.l.b16 %v278
      %v342 = vunpack.c.l.b16 %v279
      %v343 = vunpack.c.l.b16 %v280
      %v344 = vunpack.c.l.b16 %v281
      %v345 = vunpack.c.l.b16 %v282
      %v346 = vunpack.c.l.b16 %v283
      %v347 = vunpack.c.l.b16 %v284
      %v348 = vunpack.c.l.b16 %v285
      %v349 = vunpack.c.l.b16 %v286
      %v350 = vunpack.c.l.b16 %v287
      %v351 = vunpack.c.l.b16 %v288
      %v352 = vunpack.c.l.b16 %v289
      %v353 = vunpack.c.l.b16 %v290
      %v354 = vunpack.c.l.b16 %v291
      %v355 = vunpack.c.l.b16 %v292
      %v356 = vunpack.c.l.b16 %v293
      %v357 = vpack.c.b16 %v342, %v341
      %v358 = vpack.c.b16 %v344, %v343
      %v359 = vpack.c.b16 %v346, %v345
      %v360 = vpack.c.b16 %v348, %v347
      %v361 = vpack.c.b16 %v350, %v349
      %v362 = vpack.c.b16 %v352, %v351
      %v363 = vpack.c.b16 %v354, %v353
      %v364 = vpack.c.b16 %v356, %v355
      %373 = vmatprep.subr.bf16.mxu0 0
      %374 = vmatpush1.bf16.msra.mxu0 %v357
      %375 = vmatprep.subr.bf16.mxu0 0
      %376 = vmatpush1.bf16.msra.mxu0 %v358
      %377 = vmatprep.subr.bf16.mxu0 0
      %378 = vmatpush1.bf16.msra.mxu0 %v359
      %379 = vmatprep.subr.bf16.mxu0 0
      %380 = vmatpush1.bf16.msra.mxu0 %v360
      %381 = vmatprep.subr.bf16.mxu0 0
      %382 = vmatpush1.bf16.msra.mxu0 %v361
      %383 = vmatprep.subr.bf16.mxu0 0
      %384 = vmatpush1.bf16.msra.mxu0 %v362
      %385 = vmatprep.subr.bf16.mxu0 0
      %386 = vmatpush1.bf16.msra.mxu0 %v363
      %387 = vmatprep.subr.bf16.mxu0 0
      %388 = vmatpush1.bf16.msra.mxu0 %v364
      %389 = vmatprep.subr.bf16.mxu0 0
      %390 = vmatpush1.bf16.msra.mxu0 0
      %391 = vmatprep.subr.bf16.mxu0 0
      %392 = vmatpush1.bf16.msra.mxu0 0
      %393 = vmatprep.subr.bf16.mxu0 0
      %394 = vmatpush1.bf16.msra.mxu0 0
      %395 = vmatprep.subr.bf16.mxu0 0
      %396 = vmatpush1.bf16.msra.mxu0 0
      %397 = vmatprep.subr.bf16.mxu0 0
      %398 = vmatpush1.bf16.msra.mxu0 0
      %399 = vmatprep.subr.bf16.mxu0 0
      %400 = vmatpush1.bf16.msra.mxu0 0
      %401 = vmatprep.subr.bf16.mxu0 0
      %402 = vmatpush1.bf16.msra.mxu0 0
      %403 = vmatprep.subr.bf16.mxu0 0
      %404 = vmatpush1.bf16.msra.mxu0 0
      %405 = vmatprep.mubr.bf16.mxu0 0
      %406 = vmatmul.mubr.bf16.gmra.mrb[0].mxu0 %v317
      %v407 = vpop.f32.mrb[0].mxu0
      %v408 = vadd.f32 %v299, %v407
      %v409 = vpop.f32.mrb[0].mxu0
      %v410 = vpop.f32.mrb[0].mxu0
      %v411 = vadd.f32 %v299, %v410
      %v412 = vpop.f32.mrb[0].mxu0
      %413 = vmatprep.mubr.bf16.mxu0 0
      %414 = vmatmul.mubr.bf16.gmra.mrb[0].mxu0 %v318
      %v415 = vpop.f32.mrb[0].mxu0
      %v416 = vadd.f32 %v299, %v415
      %v417 = vpop.f32.mrb[0].mxu0
      %v418 = vpop.f32.mrb[0].mxu0
      %v419 = vadd.f32 %v299, %v418
      %v420 = vpop.f32.mrb[0].mxu0
      %421 = vmatprep.mubr.bf16.mxu0 0
      %422 = vmatmul.mubr.bf16.gmra.mrb[0].mxu0 %v319
      %v423 = vpop.f32.mrb[0].mxu0
      %v424 = vadd.f32 %v299, %v423
      %v425 = vpop.f32.mrb[0].mxu0
      %v426 = vpop.f32.mrb[0].mxu0
      %v427 = vadd.f32 %v299, %v426
      %v428 = vpop.f32.mrb[0].mxu0
      %429 = vmatprep.mubr.bf16.mxu0 0
      %430 = vmatmul.mubr.bf16.gmra.mrb[0].mxu0 %v320
      %v431 = vpop.f32.mrb[0].mxu0
      %v432 = vadd.f32 %v299, %v431
      %v433 = vpop.f32.mrb[0].mxu0
      %v434 = vpop.f32.mrb[0].mxu0
      %v435 = vadd.f32 %v299, %v434
      %v436 = vpop.f32.mrb[0].mxu0
      %437 = vdwg.mxu0
      %v438 = vmax.f32 %v408, 0.0
      %v439 = vmax.f32 %v411, 0.0
      %v440 = vmax.f32 %v416, 0.0
      %v441 = vmax.f32 %v419, 0.0
      %v442 = vmax.f32 %v424, 0.0
      %v443 = vmax.f32 %v427, 0.0
      %v444 = vmax.f32 %v432, 0.0
      %v445 = vmax.f32 %v435, 0.0
      %v446 = vpack.c.bf16 %v439, %v438
      %v447 = vpack.c.bf16 %v441, %v440
      %v448 = vpack.c.bf16 %v443, %v442
      %v449 = vpack.c.bf16 %v445, %v444
      %v454 = vunpack.c.l.b16 %v446
      %v455 = vunpack.c.h.b16 %v446
      %v456 = vunpack.c.l.b16 %v447
      %v457 = vunpack.c.h.b16 %v447
      %v458 = vunpack.c.l.b16 %v448
      %v459 = vunpack.c.h.b16 %v448
      %v460 = vunpack.c.l.b16 %v449
      %v461 = vunpack.c.h.b16 %v449
      %v462 = vpack.c.b16 %v454, %v454
      %v463 = vpack.c.b16 %v455, %v455
      %v464 = vpack.c.b16 %v456, %v456
      %v465 = vpack.c.b16 %v457, %v457
      %v466 = vpack.c.b16 %v458, %v458
      %v467 = vpack.c.b16 %v459, %v459
      %v468 = vpack.c.b16 %v460, %v460
      %v469 = vpack.c.b16 %v461, %v461
      %478 = vst [vmem:[%s261] sm:$0xf] %v462
      %479 = vst [vmem:[%s261 + $0x4] sm:$0xf] %v463
      %480 = vst [vmem:[%s261 + $0x8] sm:$0xf] %v464
      %481 = vst [vmem:[%s261 + $0xc] sm:$0xf] %v465
      %482 = vst [vmem:[%s261 + $0x10] sm:$0xf] %v466
      %483 = vst [vmem:[%s261 + $0x14] sm:$0xf] %v467
      %484 = vst [vmem:[%s261 + $0x18] sm:$0xf] %v468
      %485 = vst [vmem:[%s261 + $0x1c] sm:$0xf] %v469
      %v486 = vld [vmem:[%s3] sm:$0xf]
      %v487 = vld [vmem:[%s3 + $0x4] sm:$0xf]
      %v488 = vld [vmem:[%s3 + $0x8] sm:$0xf]
      %v489 = vld [vmem:[%s3 + $0xc] sm:$0xf]
      %v490 = vld [vmem:[%s3 + $0x10] sm:$0xf]
      %v491 = vld [vmem:[%s3 + $0x14] sm:$0xf]
      %v492 = vld [vmem:[%s3 + $0x18] sm:$0xf]
      %v493 = vld [vmem:[%s3 + $0x1c] sm:$0xf]
      %v494 = vld [vmem:[%s3 + $0x20] sm:$0xf]
      %v495 = vld [vmem:[%s3 + $0x24] sm:$0xf]
      %v496 = vld [vmem:[%s3 + $0x28] sm:$0xf]
      %v497 = vld [vmem:[%s3 + $0x2c] sm:$0xf]
      %v498 = vld [vmem:[%s3 + $0x30] sm:$0xf]
      %v499 = vld [vmem:[%s3 + $0x34] sm:$0xf]
      %v500 = vld [vmem:[%s3 + $0x38] sm:$0xf]
      %v501 = vld [vmem:[%s3 + $0x3c] sm:$0xf]
      %v502 = vld [vmem:[%s4] sm:$0x1]
      %v504 = vlaneseq
      %v505 = vshrl.u32 %v504, 7
      %v506 = vsub.s32 0, %v505
      %v507 = vrot.slane %v502, %v506
      %v525 = vunpack.c.l.b16 %v486
      %v526 = vunpack.c.l.b16 %v487
      %v527 = vunpack.c.l.b16 %v488
      %v528 = vunpack.c.l.b16 %v489
      %v529 = vunpack.c.l.b16 %v490
      %v530 = vunpack.c.l.b16 %v491
      %v531 = vunpack.c.l.b16 %v492
      %v532 = vunpack.c.l.b16 %v493
      %v533 = vunpack.c.l.b16 %v494
      %v534 = vunpack.c.l.b16 %v495
      %v535 = vunpack.c.l.b16 %v496
      %v536 = vunpack.c.l.b16 %v497
      %v537 = vunpack.c.l.b16 %v498
      %v538 = vunpack.c.l.b16 %v499
      %v539 = vunpack.c.l.b16 %v500
      %v540 = vunpack.c.l.b16 %v501
      %v541 = vpack.c.b16 %v526, %v525
      %v542 = vpack.c.b16 %v528, %v527
      %v543 = vpack.c.b16 %v530, %v529
      %v544 = vpack.c.b16 %v532, %v531
      %v545 = vpack.c.b16 %v534, %v533
      %v546 = vpack.c.b16 %v536, %v535
      %v547 = vpack.c.b16 %v538, %v537
      %v548 = vpack.c.b16 %v540, %v539
      %557 = vmatprep.subr.bf16.mxu0 0
      %558 = vmatpush1.bf16.msra.mxu0 %v541
      %559 = vmatprep.subr.bf16.mxu0 0
      %560 = vmatpush1.bf16.msra.mxu0 %v542
      %561 = vmatprep.subr.bf16.mxu0 0
      %562 = vmatpush1.bf16.msra.mxu0 %v543
      %563 = vmatprep.subr.bf16.mxu0 0
      %564 = vmatpush1.bf16.msra.mxu0 %v544
      %565 = vmatprep.subr.bf16.mxu0 0
      %566 = vmatpush1.bf16.msra.mxu0 %v545
      %567 = vmatprep.subr.bf16.mxu0 0
      %568 = vmatpush1.bf16.msra.mxu0 %v546
      %569 = vmatprep.subr.bf16.mxu0 0
      %570 = vmatpush1.bf16.msra.mxu0 %v547
      %571 = vmatprep.subr.bf16.mxu0 0
      %572 = vmatpush1.bf16.msra.mxu0 %v548
      %573 = vmatprep.subr.bf16.mxu0 0
      %574 = vmatpush1.bf16.msra.mxu0 0
      %575 = vmatprep.subr.bf16.mxu0 0
      %576 = vmatpush1.bf16.msra.mxu0 0
      %577 = vmatprep.subr.bf16.mxu0 0
      %578 = vmatpush1.bf16.msra.mxu0 0
      %579 = vmatprep.subr.bf16.mxu0 0
      %580 = vmatpush1.bf16.msra.mxu0 0
      %581 = vmatprep.subr.bf16.mxu0 0
      %582 = vmatpush1.bf16.msra.mxu0 0
      %583 = vmatprep.subr.bf16.mxu0 0
      %584 = vmatpush1.bf16.msra.mxu0 0
      %585 = vmatprep.subr.bf16.mxu0 0
      %586 = vmatpush1.bf16.msra.mxu0 0
      %587 = vmatprep.subr.bf16.mxu0 0
      %588 = vmatpush1.bf16.msra.mxu0 0
      %589 = vmatprep.mubr.bf16.mxu0 0
      %590 = vmatmul.mubr.bf16.gmra.mrb[0].mxu0 %v446
      %v591 = vpop.f32.mrb[0].mxu0
      %v592 = vadd.f32 %v507, %v591
      %v593 = vpop.f32.mrb[0].mxu0
      %v594 = vpop.f32.mrb[0].mxu0
      %v595 = vadd.f32 %v507, %v594
      %v596 = vpop.f32.mrb[0].mxu0
      %597 = vmatprep.mubr.bf16.mxu0 0
      %598 = vmatmul.mubr.bf16.gmra.mrb[0].mxu0 %v447
      %v599 = vpop.f32.mrb[0].mxu0
      %v600 = vadd.f32 %v507, %v599
      %v601 = vpop.f32.mrb[0].mxu0
      %v602 = vpop.f32.mrb[0].mxu0
      %v603 = vadd.f32 %v507, %v602
      %v604 = vpop.f32.mrb[0].mxu0
      %605 = vmatprep.mubr.bf16.mxu0 0
      %606 = vmatmul.mubr.bf16.gmra.mrb[0].mxu0 %v448
      %v607 = vpop.f32.mrb[0].mxu0
      %v608 = vadd.f32 %v507, %v607
      %v609 = vpop.f32.mrb[0].mxu0
      %v610 = vpop.f32.mrb[0].mxu0
      %v611 = vadd.f32 %v507, %v610
      %v612 = vpop.f32.mrb[0].mxu0
      %613 = vmatprep.mubr.bf16.mxu0 0
      %614 = vmatmul.mubr.bf16.gmra.mrb[0].mxu0 %v449
      %v615 = vpop.f32.mrb[0].mxu0
      %v616 = vadd.f32 %v507, %v615
      %v617 = vpop.f32.mrb[0].mxu0
      %v618 = vpop.f32.mrb[0].mxu0
      %v619 = vadd.f32 %v507, %v618
      %v620 = vpop.f32.mrb[0].mxu0
      %621 = vdwg.mxu0
      %v622 = vmax.f32 %v592, 0.0
      %v623 = vmax.f32 %v595, 0.0
      %v624 = vmax.f32 %v600, 0.0
      %v625 = vmax.f32 %v603, 0.0
      %v626 = vmax.f32 %v608, 0.0
      %v627 = vmax.f32 %v611, 0.0
      %v628 = vmax.f32 %v616, 0.0
      %v629 = vmax.f32 %v619, 0.0
      %v630 = vpack.c.bf16 %v623, %v622
      %v631 = vpack.c.bf16 %v625, %v624
      %v632 = vpack.c.bf16 %v627, %v626
      %v633 = vpack.c.bf16 %v629, %v628
      %v638 = vunpack.c.l.b16 %v630
      %v639 = vunpack.c.h.b16 %v630
      %v640 = vunpack.c.l.b16 %v631
      %v641 = vunpack.c.h.b16 %v631
      %v642 = vunpack.c.l.b16 %v632
      %v643 = vunpack.c.h.b16 %v632
      %v644 = vunpack.c.l.b16 %v633
      %v645 = vunpack.c.h.b16 %v633
      %v646 = vpack.c.b16 %v638, %v638
      %v647 = vpack.c.b16 %v639, %v639
      %v648 = vpack.c.b16 %v640, %v640
      %v649 = vpack.c.b16 %v641, %v641
      %v650 = vpack.c.b16 %v642, %v642
      %v651 = vpack.c.b16 %v643, %v643
      %v652 = vpack.c.b16 %v644, %v644
      %v653 = vpack.c.b16 %v645, %v645
      %662 = vst [vmem:[%s267] sm:$0xf] %v646
      %663 = vst [vmem:[%s267 + $0x4] sm:$0xf] %v647
      %664 = vst [vmem:[%s267 + $0x8] sm:$0xf] %v648
      %665 = vst [vmem:[%s267 + $0xc] sm:$0xf] %v649
      %666 = vst [vmem:[%s267 + $0x10] sm:$0xf] %v650
      %667 = vst [vmem:[%s267 + $0x14] sm:$0xf] %v651
      %668 = vst [vmem:[%s267 + $0x18] sm:$0xf] %v652
      %669 = vst [vmem:[%s267 + $0x1c] sm:$0xf] %v653
      %s670 = smul.u32 8, %s18
      %p671 = scmp.lt.s32.totalorder %s670, 15
      %s672 = scalar_select %p671, %s670, 15
      %s673 = smul.addr %s672, 4
      %s674 = scalar_lea.vmem %s5, %s673
      %s675 = smul.u32 8, %s18
      %p676 = scmp.lt.s32.totalorder %s675, 15
      %s677 = scalar_select %p676, %s675, 15
      %s678 = smul.addr %s677, 4
      %s679 = scalar_lea.vmem %s6, %s678
      // Predicated region
      $region41: #{_lambda_.4} parent=39 // pred_check
        %p680 = pneg %p146
      $region42: #{_lambda_.4} parent=39 // pred_check_branch
        %682 = sbr.rel (%p680) target = $region44
      $region43: #{_lambda_.4} parent=39 // pred_region
        %s683 = smul.u32 8, %s18
      $region44: #{_lambda_.4} parent=39 // pred_fallthru
        _
      // Predicated region
      $region45: #{_lambda_.4} parent=39 // pred_check
        %p684 = pneg %p172
      $region46: #{_lambda_.4} parent=39 // pred_check_branch
        %686 = sbr.rel (%p684) target = $region48
      $region47: #{_lambda_.4} parent=39 // pred_region
        %s687 = smul.u32 8, %s18
      $region48: #{_lambda_.4} parent=39 // pred_fallthru
        _
    $region40: #{_lambda_.4} parent=5 // pred_fallthru
      _
    %p688 = scmp.le.s32.totalorder 2, %s13
    // Predicated region
    $region49: #{_lambda_.4} parent=5 // pred_check
      %p689 = pneg %p688
    $region50: #{_lambda_.4} parent=5 // pred_check_branch
      %691 = sbr.rel (%p689) target = $region52
    $region51: #{_lambda_.4} parent=5 // pred_region
      %s692 = ssub.s32 %s13, 2
      // Predicated region
      $region53: #{_lambda_.4} parent=51 // pred_check
        %p693 = pneg %p152
      $region54: #{_lambda_.4} parent=51 // pred_check_branch
        %695 = sbr.rel (%p693) target = $region56
      $region55: #{_lambda_.4} parent=51 // pred_region
        %s696 = smul.u32 8, %s19
        %p697 = scmp.lt.s32.totalorder %s696, 15
        %s698 = scalar_select %p697, %s696, 15
        %s699 = smul.addr %s698, 4
        %s700 = scalar_lea.vmem %s5, %s699
      $region56: #{_lambda_.4} parent=51 // pred_fallthru
        _
      // Predicated region
      $region57: #{_lambda_.4} parent=51 // pred_check
        %p701 = pneg %p178
      $region58: #{_lambda_.4} parent=51 // pred_check_branch
        %703 = sbr.rel (%p701) target = $region60
      $region59: #{_lambda_.4} parent=51 // pred_region
        %s704 = smul.u32 8, %s19
        %p705 = scmp.lt.s32.totalorder %s704, 15
        %s706 = scalar_select %p705, %s704, 15
        %s707 = smul.addr %s706, 4
        %s708 = scalar_lea.vmem %s6, %s707
      $region60: #{_lambda_.4} parent=51 // pred_fallthru
        _
    $region52: #{_lambda_.4} parent=5 // pred_fallthru
      _
  $region6: #{_lambda_.4} parent=0 // loop_footer
    %s17 = sadd.s32 1, %s13
  $region7: #{_lambda_.4} parent=0 // loop_footer_branch
    %12 = sbr.rel target = $region3
  $region8: #{_lambda_.4} parent=0 // loop_exit
    _

// kernel: _lambda_.6
$region0: #{_lambda_.6}
  #allocation0 [shape = 'u32[]', space=smem, size = 0x4, offset = 0x4, fixed_abs, tag = 'smem constant byte address 0x4 - core index']
  #allocation1 [shape = 'u32[144,128]{1,0:T(1,128)}', space=vmem, size = 0x12000, scoped, tag = 'internal scratch']
  %s0 = inlined_call_operand.vmem [shape: bf16[3,8,80], index: 0, kind: input, shape index: {}]
  %s1 = inlined_call_operand.vmem [shape: bf16[3,8,64], index: 1, kind: input, shape index: {}]
  %s2 = inlined_call_operand.vmem [shape: bf16[8,64], index: 2, kind: output, shape index: {}]
  %s3 = sld [smem:[#allocation0]]
  $region18: #{_lambda_.6} parent=0
    _
  %s5 = ssub.s32 1, %s3
  %s6 = scalar_select 0, %s5, %s3
  // Predicated region
  $region2: #{_lambda_.6} parent=0 // pred_check
    _
  $region3: #{_lambda_.6} parent=0 // pred_check_branch
    %8 = sbr.rel (0) target = $region5
  $region4: #{_lambda_.6} parent=0 // pred_region
    _
  $region5: #{_lambda_.6} parent=0 // pred_fallthru
    _
  // Predicated region
  $region6: #{_lambda_.6} parent=0 // pred_check
    _
  $region7: #{_lambda_.6} parent=0 // pred_check_branch
    %10 = sbr.rel (0) target = $region9
  $region8: #{_lambda_.6} parent=0 // pred_region
    _
  $region9: #{_lambda_.6} parent=0 // pred_fallthru
    _
  %v12 = vld [vmem:[%s0] sm:$0xf]
  %v13 = vld [vmem:[%s0 + $0x4] sm:$0xf]
  %v14 = vld [vmem:[%s0 + $0x8] sm:$0xf]
  %vm15 = vcmask 650240
  %v18 = vsel %vm15, %v12, 4286644096
  %v21 = vsel %vm15, %v13, 4286644096
  %v24 = vsel %vm15, %v14, 4286644096
  %v26 = vmax.bf16 %v18, %v21
  %v27 = vmax.bf16 %v26, %v24
  %v28 = vld [vmem:[%s1] sm:$0xf]
  %v29 = vld [vmem:[%s1 + $0x4] sm:$0xf]
  %v30 = vld [vmem:[%s1 + $0x8] sm:$0xf]
  %vm31 = vcmask 519168
  %v33 = vsel %vm31, %v28, 4286644096
  %v36 = vsel %vm31, %v29, 4286644096
  %v39 = vsel %vm31, %v30, 4286644096
  %v41 = vmax.bf16 %v33, %v36
  %v42 = vmax.bf16 %v41, %v39
  %44 = vrot.lane.b32.xlu0 %v27, 112
  %v45 = vpop.permute.xlu0 %44
  %v47 = vmax.bf16 %v27, %v45
  %v48 = vmax.bf16 %v47, %v42
  %49 = vst.msk [vmem:[%s2] sm:$0xf] %vm31, %v48
  // Predicated region
  $region10: #{_lambda_.6} parent=0 // pred_check
    _
  $region11: #{_lambda_.6} parent=0 // pred_check_branch
    %51 = sbr.rel (0) target = $region13
  $region12: #{_lambda_.6} parent=0 // pred_region
    _
  $region13: #{_lambda_.6} parent=0 // pred_fallthru
    _
  // Predicated region
  $region14: #{_lambda_.6} parent=0 // pred_check
    _
  $region15: #{_lambda_.6} parent=0 // pred_check_branch
    %53 = sbr.rel (0) target = $region17
  $region16: #{_lambda_.6} parent=0 // pred_region
    _
  $region17: #{_lambda_.6} parent=0 // pred_fallthru
    _

// kernel: _lambda_.7
$region0: #{_lambda_.7}
  #allocation0 [shape = 'u32[]', space=smem, size = 0x4, offset = 0x4, fixed_abs, tag = 'smem constant byte address 0x4 - core index']
  #allocation1 [shape = 'u32[144,128]{1,0:T(1,128)}', space=vmem, size = 0x12000, scoped, tag = 'internal scratch']
  %s0 = inlined_call_operand.vmem [shape: bf16[32,384], index: 0, kind: input, shape index: {}]
  %s1 = inlined_call_operand.vmem [shape: bf16[384,128], index: 1, kind: input, shape index: {}]
  %s2 = inlined_call_operand.vmem [shape: f32[1,128], index: 2, kind: input, shape index: {}]
  %s3 = inlined_call_operand.hbm [shape: f32[32,128], index: 3, kind: output, shape index: {}]
  %s4 = sld [smem:[#allocation0]]
  $region45: #{_lambda_.7} parent=0
    _
  %s6 = ssub.s32 1, %s4
  %s7 = scalar_select 0, %s6, %s4
  $region1: #{_lambda_.7} parent=0
    #allocation2 [shape = 'u8[16384]{0}', space=vmem, size = 0x4000, scoped, tag = 'output window, operand 0']
    #allocation3 [shape = 's32[2]{0}', space=sflag, size = 0x8, scoped, tag = 'scoped memory for _lambda_.7']
    %8 = vsyncpa [#allocation3], 0
    %s9 = scalar_lea.sflag [#allocation3], 1
    %10 = vsyncpa %s9, 0
    loop: start=0, step=1, limit=4
    $region2: #{_lambda_.7} parent=1 // loop_pre_header
      _
    $region3: #{_lambda_.7} parent=1 // loop_header
      %s12 = sphi 0, %s16
      %p13 = scmp.ge.s32.totalorder %s12, 4
      %s22 = sphi 0, %s24
      %s25 = sphi 0, %s22
      %s26 = sphi 0, %s25
      %s42 = sphi 0, %s26
      %s46 = sphi 0, %s46
      %s48 = sphi 0, %s46
      %s49 = sphi 0, %s48
      %s63 = sphi 0, %s49
      %s67 = sphi 0, %s67
      %s69 = sphi 0, %s67
      %s70 = sphi 0, %s69
      %s84 = sphi 0, %s70
      %s90 = sphi 0, %s92
      %s93 = sphi 0, %s90
      %s94 = sphi 0, %s93
      %s110 = sphi 0, %s94
    $region4: #{_lambda_.7} parent=1 // loop_header_branch
      %15 = sbr.rel (%p13) target = $region8
    $region5: #{_lambda_.7} parent=1 // loop_body
      %s17 = ssub.s32 %s12, 1
      %s18 = ssub.s32 %s12, 2
      %s19 = sadd.s32 %s12, 1
      %s20 = ssub.s32 %s12, %s19
      %p21 = scmp.eq.s32.totalorder %s20, 0
      %s23 = sadd.s32 %s22, 1
      %s24 = scalar_select %p21, %s22, %s23
      %p27 = pneg %p21
      %p28 = scmp.eq.s32.totalorder %s12, 1
      %p29 = por %p27, %p28
      %p30 = scmp.ne.s32.totalorder %s22, %s25
      %p31 = scmp.eq.s32.totalorder %s12, 0
      %p32 = por %p30, %p31
      %p33 = scmp.ne.s32.totalorder %s22, %s25
      %p34 = scmp.eq.s32.totalorder %s17, 1
      %p35 = por %p33, %p34
      %p36 = scmp.ne.s32.totalorder %s25, %s26
      %p37 = scmp.eq.s32.totalorder %s17, 0
      %p38 = por %p36, %p37
      %p39 = scmp.ne.s32.totalorder %s25, %s26
      %p40 = scmp.eq.s32.totalorder %s18, 1
      %p41 = por %p39, %p40
      %p43 = scmp.ne.s32.totalorder %s26, %s42
      %p44 = scmp.eq.s32.totalorder %s18, 0
      %p45 = por %p43, %p44
      %s47 = sadd.s32 %s46, 1
      %p50 = scmp.eq.s32.totalorder %s12, 1
      %p51 = scmp.ne.s32.totalorder %s46, %s48
      %p52 = scmp.eq.s32.totalorder %s12, 0
      %p53 = por %p51, %p52
      %p54 = scmp.ne.s32.totalorder %s46, %s48
      %p55 = scmp.eq.s32.totalorder %s17, 1
      %p56 = por %p54, %p55
      %p57 = scmp.ne.s32.totalorder %s48, %s49
      %p58 = scmp.eq.s32.totalorder %s17, 0
      %p59 = por %p57, %p58
      %p60 = scmp.ne.s32.totalorder %s48, %s49
      %p61 = scmp.eq.s32.totalorder %s18, 1
      %p62 = por %p60, %p61
      %p64 = scmp.ne.s32.totalorder %s49, %s63
      %p65 = scmp.eq.s32.totalorder %s18, 0
      %p66 = por %p64, %p65
      %s68 = sadd.s32 %s67, 1
      %p71 = scmp.eq.s32.totalorder %s12, 1
      %p72 = scmp.ne.s32.totalorder %s67, %s69
      %p73 = scmp.eq.s32.totalorder %s12, 0
      %p74 = por %p72, %p73
      %p75 = scmp.ne.s32.totalorder %s67, %s69
      %p76 = scmp.eq.s32.totalorder %s17, 1
      %p77 = por %p75, %p76
      %p78 = scmp.ne.s32.totalorder %s69, %s70
      %p79 = scmp.eq.s32.totalorder %s17, 0
      %p80 = por %p78, %p79
      %p81 = scmp.ne.s32.totalorder %s69, %s70
      %p82 = scmp.eq.s32.totalorder %s18, 1
      %p83 = por %p81, %p82
      %p85 = scmp.ne.s32.totalorder %s70, %s84
      %p86 = scmp.eq.s32.totalorder %s18, 0
      %p87 = por %p85, %p86
      %s88 = ssub.s32 %s12, %s19
      %p89 = scmp.eq.s32.totalorder %s88, 0
      %s91 = sadd.s32 %s90, 1
      %s92 = scalar_select %p89, %s90, %s91
      %p95 = pneg %p89
      %p96 = scmp.eq.s32.totalorder %s12, 1
      %p97 = por %p95, %p96
      %p98 = scmp.ne.s32.totalorder %s90, %s93
      %p99 = scmp.eq.s32.totalorder %s12, 0
      %p100 = por %p98, %p99
      %p101 = scmp.ne.s32.totalorder %s90, %s93
      %p102 = scmp.eq.s32.totalorder %s17, 1
      %p103 = por %p101, %p102
      %p104 = scmp.ne.s32.totalorder %s93, %s94
      %p105 = scmp.eq.s32.totalorder %s17, 0
      %p106 = por %p104, %p105
      %p107 = scmp.ne.s32.totalorder %s93, %s94
      %p108 = scmp.eq.s32.totalorder %s18, 1
      %p109 = por %p107, %p108
      %p111 = scmp.ne.s32.totalorder %s94, %s110
      %p112 = scmp.eq.s32.totalorder %s18, 0
      %p113 = por %p111, %p112
      %p114 = scmp.le.s32.totalorder 1, %s12
      %p115 = scmp.lt.s32.totalorder %s12, 3
      %p116 = pnand %p114, %p115
      %p117 = pneg %p116
      // Predicated region
      $region9: #{_lambda_.7} parent=5 // pred_check
        _
      $region10: #{_lambda_.7} parent=5 // pred_check_branch
        %119 = sbr.rel (%p116) target = $region12
      $region11: #{_lambda_.7} parent=5 // pred_region
        %s120 = ssub.s32 %s12, 1
        // Predicated region
        $region13: #{_lambda_.7} parent=11 // pred_check
          %p121 = pneg %p59
        $region14: #{_lambda_.7} parent=11 // pred_check_branch
          %123 = sbr.rel (%p121) target = $region16
        $region15: #{_lambda_.7} parent=11 // pred_region
          _
        $region16: #{_lambda_.7} parent=11 // pred_fallthru
          _
        // Predicated region
        $region17: #{_lambda_.7} parent=11 // pred_check
          %p124 = pneg %p80
        $region18: #{_lambda_.7} parent=11 // pred_check_branch
          %126 = sbr.rel (%p124) target = $region20
        $region19: #{_lambda_.7} parent=11 // pred_region
          _
        $region20: #{_lambda_.7} parent=11 // pred_fallthru
          _
      $region12: #{_lambda_.7} parent=5 // pred_fallthru
        _
      %p127 = scmp.lt.s32.totalorder %s12, 2
      // Predicated region
      $region21: #{_lambda_.7} parent=5 // pred_check
        %p128 = pneg %p127
      $region22: #{_lambda_.7} parent=5 // pred_check_branch
        %130 = sbr.rel (%p128) target = $region24
      $region23: #{_lambda_.7} parent=5 // pred_region
        // Predicated region
        $region25: #{_lambda_.7} parent=23 // pred_check
          %p131 = pneg %p32
        $region26: #{_lambda_.7} parent=23 // pred_check_branch
          %133 = sbr.rel (%p131) target = $region28
        $region27: #{_lambda_.7} parent=23 // pred_region
          %s134 = smul.u32 2, %s12
          %p135 = scmp.lt.s32.totalorder %s134, 3
          %s136 = scalar_select %p135, %s134, 3
          %s137 = smul.addr %s136, 3
          %s138 = smul.addr %s137, 4
          %s139 = scalar_lea.vmem %s0, %s138
          %s140 = smul.u32 2, %s12
        $region28: #{_lambda_.7} parent=23 // pred_fallthru
          _
      $region24: #{_lambda_.7} parent=5 // pred_fallthru
        _
      %p141 = scmp.le.s32.totalorder 1, %s12
      %p142 = scmp.lt.s32.totalorder %s12, 3
      %p143 = pnand %p141, %p142
      %p144 = pneg %p143
      // Predicated region
      $region29: #{_lambda_.7} parent=5 // pred_check
        _
      $region30: #{_lambda_.7} parent=5 // pred_check_branch
        %146 = sbr.rel (%p143) target = $region32
      $region31: #{_lambda_.7} parent=5 // pred_region
        %s147 = ssub.s32 %s12, 1
        %s148 = smul.u32 2, %s17
        %p149 = scmp.lt.s32.totalorder %s148, 3
        %s150 = scalar_select %p149, %s148, 3
        %s151 = smul.addr %s150, 3
        %s152 = smul.addr %s151, 4
        %s153 = scalar_lea.vmem %s0, %s152
        %p154 = pneg %p38
        %p155 = pneg %p35
        %p156 = pneg %p59
        %p157 = pneg %p56
        %p158 = pneg %p80
        %p159 = pneg %p77
        %p160 = pneg %p106
        %p161 = pneg %p103
        %s162 = sand.u32 %s93, 1
        %s163 = scalar_lea.sflag [#allocation3], %s162
        %s164 = sand.u32 %s93, 1
        %s165 = smul.addr %s164, 16
        %s166 = scalar_lea.vmem [#allocation2], %s165
        %s167 = smul.u32 2, %s17
        %p168 = scmp.lt.s32.totalorder %s167, 3
        %s169 = scalar_select %p168, %s167, 3
        %s170 = smul.addr %s169, 3
        %s171 = smul.addr %s170, 4
        %s172 = scalar_lea.vmem %s0, %s171
        %s173 = smul.u32 2, %s17
        %s174 = smul.u32 2, %s17
        %v176 = vld [vmem:[%s172] sm:$0xff]
        %v177 = vld [vmem:[%s172 + $0x8] sm:$0xf]
        %v178 = vld [vmem:[%s172 + $0xc] sm:$0xff]
        %v179 = vld [vmem:[%s172 + $0x14] sm:$0xf]
        %v180 = vld [vmem:[%s1] sm:$0xf]
        %v181 = vld [vmem:[%s1 + $0x4] sm:$0xf]
        %v182 = vld [vmem:[%s1 + $0x8] sm:$0xf]
        %v183 = vld [vmem:[%s1 + $0xc] sm:$0xf]
        %v184 = vld [vmem:[%s1 + $0x10] sm:$0xf]
        %v185 = vld [vmem:[%s1 + $0x14] sm:$0xf]
        %v186 = vld [vmem:[%s1 + $0x18] sm:$0xf]
        %v187 = vld [vmem:[%s1 + $0x1c] sm:$0xf]
        %v188 = vld [vmem:[%s1 + $0x20] sm:$0xf]
        %v189 = vld [vmem:[%s1 + $0x24] sm:$0xf]
        %v190 = vld [vmem:[%s1 + $0x28] sm:$0xf]
        %v191 = vld [vmem:[%s1 + $0x2c] sm:$0xf]
        %v192 = vld [vmem:[%s1 + $0x30] sm:$0xf]
        %v193 = vld [vmem:[%s1 + $0x34] sm:$0xf]
        %v194 = vld [vmem:[%s1 + $0x38] sm:$0xf]
        %v195 = vld [vmem:[%s1 + $0x3c] sm:$0xf]
        %v196 = vld [vmem:[%s1 + $0x40] sm:$0xf]
        %v197 = vld [vmem:[%s1 + $0x44] sm:$0xf]
        %v198 = vld [vmem:[%s1 + $0x48] sm:$0xf]
        %v199 = vld [vmem:[%s1 + $0x4c] sm:$0xf]
        %v200 = vld [vmem:[%s1 + $0x50] sm:$0xf]
        %v201 = vld [vmem:[%s1 + $0x54] sm:$0xf]
        %v202 = vld [vmem:[%s1 + $0x58] sm:$0xf]
        %v203 = vld [vmem:[%s1 + $0x5c] sm:$0xf]
        %v204 = vld [vmem:[%s1 + $0x60] sm:$0xf]
        %v205 = vld [vmem:[%s1 + $0x64] sm:$0xf]
        %v206 = vld [vmem:[%s1 + $0x68] sm:$0xf]
        %v207 = vld [vmem:[%s1 + $0x6c] sm:$0xf]
        %v208 = vld [vmem:[%s1 + $0x70] sm:$0xf]
        %v209 = vld [vmem:[%s1 + $0x74] sm:$0xf]
        %v210 = vld [vmem:[%s1 + $0x78] sm:$0xf]
        %v211 = vld [vmem:[%s1 + $0x7c] sm:$0xf]
        %v212 = vld [vmem:[%s1 + $0x80] sm:$0xf]
        %v213 = vld [vmem:[%s1 + $0x84] sm:$0xf]
        %v214 = vld [vmem:[%s1 + $0x88] sm:$0xf]
        %v215 = vld [vmem:[%s1 + $0x8c] sm:$0xf]
        %v216 = vld [vmem:[%s1 + $0x90] sm:$0xf]
        %v217 = vld [vmem:[%s1 + $0x94] sm:$0xf]
        %v218 = vld [vmem:[%s1 + $0x98] sm:$0xf]
        %v219 = vld [vmem:[%s1 + $0x9c] sm:$0xf]
        %v220 = vld [vmem:[%s1 + $0xa0] sm:$0xf]
        %v221 = vld [vmem:[%s1 + $0xa4] sm:$0xf]
        %v222 = vld [vmem:[%s1 + $0xa8] sm:$0xf]
        %v223 = vld [vmem:[%s1 + $0xac] sm:$0xf]
        %v224 = vld [vmem:[%s1 + $0xb0] sm:$0xf]
        %v225 = vld [vmem:[%s1 + $0xb4] sm:$0xf]
        %v226 = vld [vmem:[%s1 + $0xb8] sm:$0xf]
        %v227 = vld [vmem:[%s1 + $0xbc] sm:$0xf]
        %v228 = vld [vmem:[%s2] sm:$0x1]
        %v230 = vlaneseq
        %v231 = vshrl.u32 %v230, 7
        %v232 = vsub.s32 0, %v231
        %v233 = vrot.slane %v228, %v232
        %v239 = vunpack.c.l.b16 %v176
        %v240 = vunpack.c.h.b16 %v176
        %v241 = vunpack.c.l.b16 %v177
        %v242 = vunpack.c.l.b16 %v178
        %v243 = vunpack.c.h.b16 %v178
        %v244 = vunpack.c.l.b16 %v179
        %v245 = vpack.c.b16 %v242, %v239
        %v246 = vpack.c.b16 %v243, %v240
        %v247 = vpack.c.b16 %v244, %v241
        %v299 = vunpack.c.l.b16 %v180
        %v300 = vunpack.c.l.b16 %v181
        %v301 = vunpack.c.l.b16 %v182
        %v302 = vunpack.c.l.b16 %v183
        %v303 = vunpack.c.l.b16 %v184
        %v304 = vunpack.c.l.b16 %v185
        %v305 = vunpack.c.l.b16 %v186
        %v306 = vunpack.c.l.b16 %v187
        %v307 = vunpack.c.l.b16 %v188
        %v308 = vunpack.c.l.b16 %v189
        %v309 = vunpack.c.l.b16 %v190
        %v310 = vunpack.c.l.b16 %v191
        %v311 = vunpack.c.l.b16 %v192
        %v312 = vunpack.c.l.b16 %v193
        %v313 = vunpack.c.l.b16 %v194
        %v314 = vunpack.c.l.b16 %v195
        %v315 = vunpack.c.l.b16 %v196
        %v316 = vunpack.c.l.b16 %v197
        %v317 = vunpack.c.l.b16 %v198
        %v318 = vunpack.c.l.b16 %v199
        %v319 = vunpack.c.l.b16 %v200
        %v320 = vunpack.c.l.b16 %v201
        %v321 = vunpack.c.l.b16 %v202
        %v322 = vunpack.c.l.b16 %v203
        %v323 = vunpack.c.l.b16 %v204
        %v324 = vunpack.c.l.b16 %v205
        %v325 = vunpack.c.l.b16 %v206
        %v326 = vunpack.c.l.b16 %v207
        %v327 = vunpack.c.l.b16 %v208
        %v328 = vunpack.c.l.b16 %v209
        %v329 = vunpack.c.l.b16 %v210
        %v330 = vunpack.c.l.b16 %v211
        %v331 = vunpack.c.l.b16 %v212
        %v332 = vunpack.c.l.b16 %v213
        %v333 = vunpack.c.l.b16 %v214
        %v334 = vunpack.c.l.b16 %v215
        %v335 = vunpack.c.l.b16 %v216
        %v336 = vunpack.c.l.b16 %v217
        %v337 = vunpack.c.l.b16 %v218
        %v338 = vunpack.c.l.b16 %v219
        %v339 = vunpack.c.l.b16 %v220
        %v340 = vunpack.c.l.b16 %v221
        %v341 = vunpack.c.l.b16 %v222
        %v342 = vunpack.c.l.b16 %v223
        %v343 = vunpack.c.l.b16 %v224
        %v344 = vunpack.c.l.b16 %v225
        %v345 = vunpack.c.l.b16 %v226
        %v346 = vunpack.c.l.b16 %v227
        %v347 = vpack.c.b16 %v300, %v299
        %v348 = vpack.c.b16 %v302, %v301
        %v349 = vpack.c.b16 %v304, %v303
        %v350 = vpack.c.b16 %v306, %v305
        %v351 = vpack.c.b16 %v308, %v307
        %v352 = vpack.c.b16 %v310, %v309
        %v353 = vpack.c.b16 %v312, %v311
        %v354 = vpack.c.b16 %v314, %v313
        %v355 = vpack.c.b16 %v316, %v315
        %v356 = vpack.c.b16 %v318, %v317
        %v357 = vpack.c.b16 %v320, %v319
        %v358 = vpack.c.b16 %v322, %v321
        %v359 = vpack.c.b16 %v324, %v323
        %v360 = vpack.c.b16 %v326, %v325
        %v361 = vpack.c.b16 %v328, %v327
        %v362 = vpack.c.b16 %v330, %v329
        %v363 = vpack.c.b16 %v332, %v331
        %v364 = vpack.c.b16 %v334, %v333
        %v365 = vpack.c.b16 %v336, %v335
        %v366 = vpack.c.b16 %v338, %v337
        %v367 = vpack.c.b16 %v340, %v339
        %v368 = vpack.c.b16 %v342, %v341
        %v369 = vpack.c.b16 %v344, %v343
        %v370 = vpack.c.b16 %v346, %v345
        %395 = vmatprep.subr.bf16.mxu0 0
        %396 = vmatpush1.bf16.msra.mxu0 %v347
        %397 = vmatprep.subr.bf16.mxu0 0
        %398 = vmatpush1.bf16.msra.mxu0 %v348
        %399 = vmatprep.subr.bf16.mxu0 0
        %400 = vmatpush1.bf16.msra.mxu0 %v349
        %401 = vmatprep.subr.bf16.mxu0 0
        %402 = vmatpush1.bf16.msra.mxu0 %v350
        %403 = vmatprep.subr.bf16.mxu0 0
        %404 = vmatpush1.bf16.msra.mxu0 %v351
        %405 = vmatprep.subr.bf16.mxu0 0
        %406 = vmatpush1.bf16.msra.mxu0 %v352
        %407 = vmatprep.subr.bf16.mxu0 0
        %408 = vmatpush1.bf16.msra.mxu0 %v353
        %409 = vmatprep.subr.bf16.mxu0 0
        %410 = vmatpush1.bf16.msra.mxu0 %v354
        %411 = vmatprep.subr.bf16.mxu0 0
        %412 = vmatpush1.bf16.msra.mxu0 %v355
        %413 = vmatprep.subr.bf16.mxu0 0
        %414 = vmatpush1.bf16.msra.mxu0 %v356
        %415 = vmatprep.subr.bf16.mxu0 0
        %416 = vmatpush1.bf16.msra.mxu0 %v357
        %417 = vmatprep.subr.bf16.mxu0 0
        %418 = vmatpush1.bf16.msra.mxu0 %v358
        %419 = vmatprep.subr.bf16.mxu0 0
        %420 = vmatpush1.bf16.msra.mxu0 %v359
        %421 = vmatprep.subr.bf16.mxu0 0
        %422 = vmatpush1.bf16.msra.mxu0 %v360
        %423 = vmatprep.subr.bf16.mxu0 0
        %424 = vmatpush1.bf16.msra.mxu0 %v361
        %425 = vmatprep.subr.bf16.mxu0 0
        %426 = vmatpush1.bf16.msra.mxu0 %v362
        %427 = vmatprep.mubr.bf16.mxu0 %v246
        %428 = vmatmul.mubr.bf16.gmra.mrb[0].mxu0 %v245
        %v429 = vpop.f32.mrb[0].mxu0
        %v430 = vadd.f32 %v233, %v429
        %v431 = vpop.f32.mrb[0].mxu0
        %v432 = vpop.f32.mrb[0].mxu0
        %v433 = vadd.f32 %v233, %v432
        %v434 = vpop.f32.mrb[0].mxu0
        %435 = vdwg.mxu0
        %436 = vmatprep.subr.bf16.mxu0 0
        %437 = vmatpush1.bf16.msra.mxu0 %v363
        %438 = vmatprep.subr.bf16.mxu0 0
        %439 = vmatpush1.bf16.msra.mxu0 %v364
        %440 = vmatprep.subr.bf16.mxu0 0
        %441 = vmatpush1.bf16.msra.mxu0 %v365
        %442 = vmatprep.subr.bf16.mxu0 0
        %443 = vmatpush1.bf16.msra.mxu0 %v366
        %444 = vmatprep.subr.bf16.mxu0 0
        %445 = vmatpush1.bf16.msra.mxu0 %v367
        %446 = vmatprep.subr.bf16.mxu0 0
        %447 = vmatpush1.bf16.msra.mxu0 %v368
        %448 = vmatprep.subr.bf16.mxu0 0
        %449 = vmatpush1.bf16.msra.mxu0 %v369
        %450 = vmatprep.subr.bf16.mxu0 0
        %451 = vmatpush1.bf16.msra.mxu0 %v370
        %452 = vmatprep.subr.bf16.mxu0 0
        %453 = vmatpush1.bf16.msra.mxu0 0
        %454 = vmatprep.subr.bf16.mxu0 0
        %455 = vmatpush1.bf16.msra.mxu0 0
        %456 = vmatprep.subr.bf16.mxu0 0
        %457 = vmatpush1.bf16.msra.mxu0 0
        %458 = vmatprep.subr.bf16.mxu0 0
        %459 = vmatpush1.bf16.msra.mxu0 0
        %460 = vmatprep.subr.bf16.mxu0 0
        %461 = vmatpush1.bf16.msra.mxu0 0
        %462 = vmatprep.subr.bf16.mxu0 0
        %463 = vmatpush1.bf16.msra.mxu0 0
        %464 = vmatprep.subr.bf16.mxu0 0
        %465 = vmatpush1.bf16.msra.mxu0 0
        %466 = vmatprep.subr.bf16.mxu0 0
        %467 = vmatpush1.bf16.msra.mxu0 0
        %468 = vmatprep.mubr.bf16.mxu0 0
        %469 = vmatmul.mubr.bf16.gmra.mrb[0].mxu0 %v247
        %v470 = vpop.f32.mrb[0].mxu0
        %v471 = vadd.f32 %v430, %v470
        %v472 = vpop.f32.mrb[0].mxu0
        %v473 = vpop.f32.mrb[0].mxu0
        %v474 = vadd.f32 %v433, %v473
        %v475 = vpop.f32.mrb[0].mxu0
        %476 = vdwg.mxu0
        %v477 = vmax.f32 %v471, 0.0
        %v478 = vmax.f32 %v474, 0.0
        %479 = vst [vmem:[%s166] sm:$0xff] %v477
        %480 = vst [vmem:[%s166 + $0x8] sm:$0xff] %v478
        %s481 = sand.u32 %s93, 1
        %s482 = scalar_lea.sflag [#allocation3], %s481
        %s483 = sand.u32 %s93, 1
        %s484 = smul.addr %s483, 16
        %s485 = scalar_lea.vmem [#allocation2], %s484
        // Predicated region
        $region33: #{_lambda_.7} parent=31 // pred_check
          %p486 = pneg %p103
        $region34: #{_lambda_.7} parent=31 // pred_check_branch
          %488 = sbr.rel (%p486) target = $region36
        $region35: #{_lambda_.7} parent=31 // pred_region
          %s489 = smul.u32 2, %s17
          %s491 = ssub.s32 256, 256
          %492 = vsyncadd %s482, %s491
          %s493 = smul.addr %s489, 128
          %s494 = scalar_lea.hbm %s3, %s493
          %s495 = sshll.u32 %s485, 4
          %s496 = int_to_ptr.vmem [resolvable:$true] %s495
          %501 = dma.vmem_to_hbm [thread:$0]  %s496, 256, %s494, %s482, 128, 128, 8
        $region36: #{_lambda_.7} parent=31 // pred_fallthru
          _
      $region32: #{_lambda_.7} parent=5 // pred_fallthru
        _
      %p502 = scmp.le.s32.totalorder 2, %s12
      // Predicated region
      $region37: #{_lambda_.7} parent=5 // pred_check
        %p503 = pneg %p502
      $region38: #{_lambda_.7} parent=5 // pred_check_branch
        %505 = sbr.rel (%p503) target = $region40
      $region39: #{_lambda_.7} parent=5 // pred_region
        %s506 = ssub.s32 %s12, 2
        // Predicated region
        $region41: #{_lambda_.7} parent=39 // pred_check
          %p507 = pneg %p109
        $region42: #{_lambda_.7} parent=39 // pred_check_branch
          %509 = sbr.rel (%p507) target = $region44
        $region43: #{_lambda_.7} parent=39 // pred_region
          %s510 = sand.u32 %s94, 1
          %s511 = scalar_lea.sflag [#allocation3], %s510
          %s512 = sand.u32 %s94, 1
          %s513 = smul.addr %s512, 16
          %s514 = scalar_lea.vmem [#allocation2], %s513
          %515 = dma.done %s511, 256
        $region44: #{_lambda_.7} parent=39 // pred_fallthru
          _
      $region40: #{_lambda_.7} parent=5 // pred_fallthru
        _
    $region6: #{_lambda_.7} parent=1 // loop_footer
      %s16 = sadd.s32 1, %s12
    $region7: #{_lambda_.7} parent=1 // loop_footer_branch
      %11 = sbr.rel target = $region3
    $region8: #{_lambda_.7} parent=1 // loop_exit
      _
    %516 = vsyncpa [#allocation3], 1
    %s517 = scalar_lea.sflag [#allocation3], 1
    %518 = vsyncpa %s517, 1

</llo_original>
